<compile_context>
chip_gen: v6e
topology: v6e:2x2x1
jax: 0.10.0
libtpu: 0.0.40
codegen_flags: <defaults>
</compile_context>

<pallas_src>
import functools

import jax
import jax.numpy as jnp
from jax.experimental import pallas as pl
from jax.experimental.pallas import tpu as pltpu


def _round_up(x: int, m: int) -> int:
    return ((x + m - 1) // m) * m


def _choose_tb(B: int, tb_max: int) -> int:
    """Pick a batch tile size.

    Small B: one tile with minimal (multiple-of-8) padding.
    Large B: 256-aligned tiles with at least 2 grid steps so the batch-parallel grid
    can shard across v7x's two TensorCores (and fills the 256-wide MXU on v6e/v7x).
    """
    if B <= 256:
        return _round_up(B, 8)
    half = _round_up((B + 1) // 2, 256)
    return min(tb_max, half)


def mlp_kernel(x_ref, w1_ref, b1_ref, w2_ref, b2_ref, w3_ref, b3_ref, o_ref):
    # One batch tile per grid step; all (small) weights stay resident in VMEM.
    # bf16 operands drive the MXU at full rate; accumulation is f32; biases are f32.
    x = x_ref[...].astype(jnp.bfloat16)                                   # in-kernel cast (VPU, hidden under MXU)
    h1 = jnp.dot(x, w1_ref[...], preferred_element_type=jnp.float32) + b1_ref[...]
    h1 = jnp.maximum(h1, 0.0).astype(jnp.bfloat16)                        # ReLU -> bf16
    h2 = jnp.dot(h1, w2_ref[...], preferred_element_type=jnp.float32) + b2_ref[...]
    h2 = jnp.maximum(h2, 0.0).astype(jnp.bfloat16)                        # ReLU -> bf16
    z = jnp.dot(h2, w3_ref[...], preferred_element_type=jnp.float32) + b3_ref[...]
    o_ref[...] = z.astype(o_ref.dtype)                                    # lane-dense (tb, 128k) store


def prepare_params(params):
    """One-time prep (do NOT call per forward): cast weights to bf16 / biases to f32 and
    lane-pad the final layer to a multiple of 128 for unmasked output stores."""
    w1, b1, w2, b2, w3, b3 = params
    nout = w3.shape[1]
    nout_p = _round_up(nout, 128)
    if nout_p != nout:
        w3 = jnp.pad(w3, ((0, 0), (0, nout_p - nout)))
        b3 = jnp.pad(b3, ((0, 0), (0, nout_p - nout)))
    prepped = (
        w1.astype(jnp.bfloat16), b1.astype(jnp.float32),
        w2.astype(jnp.bfloat16), b2.astype(jnp.float32),
        w3.astype(jnp.bfloat16), b3.astype(jnp.float32),
    )
    return prepped, nout


@functools.partial(jax.jit, static_argnames=("nout", "tb"))
def net_forward(x, prepped_params, *, nout, tb=512):
    """Forward pass of Flatten -> Linear -> ReLU -> Linear -> ReLU -> Linear.

    x: [B, ...] f32 (flattened row-major like nn.Flatten, NCHW compatible).
    prepped_params: output of prepare_params() (bf16 weights, f32 biases, lane-padded layer 3).
    nout: true (unpadded) number of output features.
    """
    w1, b1, w2, b2, w3, b3 = prepped_params
    B = x.shape[0]
    xf = x.reshape(B, -1).astype(jnp.float32)
    nin, nh = w1.shape
    nout_p = w3.shape[1]

    # --- batch tiling: MXU-sized, 256-aligned tiles; >=2 grid steps when B is large ---
    tb_eff = _choose_tb(B, max(256, min(int(tb), 1024)))
    B_pad = _round_up(B, tb_eff)
    if B_pad != B:
        xf = jnp.pad(xf, ((0, B_pad - B), (0, 0)))

    grid = (B_pad // tb_eff,)
    flops = 2 * B_pad * (nin * nh + nh * nh + nh * nout_p)
    bytes_accessed = (xf.size * 4 + w1.size * 2 + w2.size * 2 + w3.size * 2
                      + b1.size * 4 + b2.size * 4 + b3.size * 4 + B_pad * nout_p * 4)

    out = pl.pallas_call(
        mlp_kernel,
        out_shape=jax.ShapeDtypeStruct((B_pad, nout_p), jnp.float32),
        grid_spec=pltpu.PrefetchScalarGridSpec(
            num_scalar_prefetch=0,
            grid=grid,
            in_specs=[
                pl.BlockSpec((tb_eff, nin), lambda i: (i, 0)),     # x tile (f32; cast in-kernel)
                pl.BlockSpec((nin, nh), lambda i: (0, 0)),         # w1 (resident, bf16)
                pl.BlockSpec((1, nh), lambda i: (0, 0)),           # b1 (f32)
                pl.BlockSpec((nh, nh), lambda i: (0, 0)),          # w2 (resident, bf16)
                pl.BlockSpec((1, nh), lambda i: (0, 0)),           # b2 (f32)
                pl.BlockSpec((nh, nout_p), lambda i: (0, 0)),      # w3 (lane-padded, bf16)
                pl.BlockSpec((1, nout_p), lambda i: (0, 0)),       # b3 (lane-padded, f32)
            ],
            out_specs=pl.BlockSpec((tb_eff, nout_p), lambda i: (i, 0)),
        ),
        compiler_params=pltpu.CompilerParams(
            dimension_semantics=("parallel",),   # batch tiles shard across TCs on v7x
        ),
        cost_estimate=pl.CostEstimate(
            flops=flops, transcendentals=0, bytes_accessed=bytes_accessed),
    )(xf, w1, b1, w2, b2, w3, b3)

    # Slice off batch padding and lane padding (jit fuses this with the kernel output copy).
    return out[:B, :nout]


def init_params(key, nin, nh, nout):
    """Deterministic init mimicking nn.Linear (uniform +/- 1/sqrt(fan_in)), stored f32."""
    ks = jax.random.split(key, 6)

    def linear(kw, kb, fan_in, fan_out):
        bound = 1.0 / jnp.sqrt(fan_in)
        w = jax.random.uniform(kw, (fan_in, fan_out), jnp.float32, -bound, bound)
        b = jax.random.uniform(kb, (1, fan_out), jnp.float32, -bound, bound)
        return w, b

    w1, b1 = linear(ks[0], ks[1], nin, nh)
    w2, b2 = linear(ks[2], ks[3], nh, nh)
    w3, b3 = linear(ks[4], ks[5], nh, nout)
    return (w1, b1, w2, b2, w3, b3)


if __name__ == "__main__":
    # Small shapes consistent with the module: image 1x16x16 -> nin=256, nh=512, nout=32.
    B, C, H, W = 8, 1, 16, 16
    nin, nh, nout = C * H * W, 512, 32

    key = jax.random.PRNGKey(0)
    kx, kp = jax.random.split(key)
    x = jax.random.normal(kx, (B, C, H, W), jnp.float32)       # NCHW like PyTorch
    params = init_params(kp, nin, nh, nout)

    # One-time weight prep (bf16 cast + lane-pad); reused across forward calls.
    prepped, nout_true = prepare_params(params)
    prepped = jax.block_until_ready(prepped)

    z = net_forward(x, prepped, nout=nout_true)
    jax.block_until_ready(z)
    assert z.shape == (B, nout)

    # Reference 1: replicate the kernel numerics (bf16 operands, f32 accumulation).
    w1, b1, w2, b2, w3, b3 = params
    xf = x.reshape(B, -1)
    bf = jnp.bfloat16
    r1 = jnp.maximum(jnp.dot(xf.astype(bf), w1.astype(bf),
                             preferred_element_type=jnp.float32) + b1, 0.0)
    r2 = jnp.maximum(jnp.dot(r1.astype(bf), w2.astype(bf),
                             preferred_element_type=jnp.float32) + b2, 0.0)
    ref_bf16 = jnp.dot(r2.astype(bf), w3.astype(bf),
                       preferred_element_type=jnp.float32) + b3

    # Reference 2: full-f32 module semantics (looser tolerance for bf16 operand rounding).
    f1 = jnp.maximum(xf @ w1 + b1, 0.0)
    f2 = jnp.maximum(f1 @ w2 + b2, 0.0)
    ref_f32 = f2 @ w3 + b3

    assert jnp.allclose(z, ref_bf16, atol=2e-3, rtol=2e-2), float(jnp.max(jnp.abs(z - ref_bf16)))
    assert jnp.allclose(z, ref_f32, atol=5e-2, rtol=5e-2), float(jnp.max(jnp.abs(z - ref_f32)))

    print("KERNEL_OK")
</pallas_src>

<mosaic_0001>
module attributes {stable_mosaic.version = 11 : i64} {
  func.func @mlp_kernel(%arg0: i32, %arg1: memref<8x256xf32, #tpu.memory_space<vmem>>, %arg2: memref<256x512xbf16, #tpu.memory_space<vmem>>, %arg3: memref<1x512xf32, #tpu.memory_space<vmem>>, %arg4: memref<512x512xbf16, #tpu.memory_space<vmem>>, %arg5: memref<1x512xf32, #tpu.memory_space<vmem>>, %arg6: memref<512x128xbf16, #tpu.memory_space<vmem>>, %arg7: memref<1x128xf32, #tpu.memory_space<vmem>>, %arg8: memref<8x128xf32, #tpu.memory_space<vmem>>) attributes {dimension_semantics = [#tpu.dimension_semantics<parallel>], iteration_bounds = array<i64: 1>, scalar_prefetch = 0 : i64, scratch_operands = 0 : i64, tpu.core_type = #tpu.core_type<tc>, window_params = [{transform_indices = @transform_0, window_bounds = array<i64: 8, 256>}, {pipeline_mode = #tpu.pipeline_mode<synchronous>, transform_indices = @transform_1, window_bounds = array<i64: 256, 512>}, {pipeline_mode = #tpu.pipeline_mode<synchronous>, transform_indices = @transform_2, window_bounds = array<i64: 1, 512>}, {pipeline_mode = #tpu.pipeline_mode<synchronous>, transform_indices = @transform_3, window_bounds = array<i64: 512, 512>}, {pipeline_mode = #tpu.pipeline_mode<synchronous>, transform_indices = @transform_4, window_bounds = array<i64: 1, 512>}, {pipeline_mode = #tpu.pipeline_mode<synchronous>, transform_indices = @transform_5, window_bounds = array<i64: 512, 128>}, {pipeline_mode = #tpu.pipeline_mode<synchronous>, transform_indices = @transform_6, window_bounds = array<i64: 1, 128>}, {transform_indices = @transform_7, window_bounds = array<i64: 8, 128>}]} {
    %c0 = arith.constant 0 : index
    %c0_0 = arith.constant 0 : index
    %0 = vector.load %arg1[%c0, %c0_0] : memref<8x256xf32, #tpu.memory_space<vmem>>, vector<8x256xf32>
    %1 = arith.truncf %0 : vector<8x256xf32> to vector<8x256xbf16>
    %c0_1 = arith.constant 0 : index
    %c0_2 = arith.constant 0 : index
    %2 = vector.load %arg2[%c0_1, %c0_2] : memref<256x512xbf16, #tpu.memory_space<vmem>>, vector<256x512xbf16>
    %cst = arith.constant dense<0.000000e+00> : vector<8x512xf32>
    %3 = tpu.matmul %1, %2, %cst {dimension_numbers = #tpu.dot_dimension_numbers<[1], [0], [0], [1], [0, 0, 1, 1], [], []>} : vector<8x256xbf16>, vector<256x512xbf16>, vector<8x512xf32> -> vector<8x512xf32>
    %c0_3 = arith.constant 0 : index
    %c0_4 = arith.constant 0 : index
    %4 = vector.load %arg3[%c0_3, %c0_4] : memref<1x512xf32, #tpu.memory_space<vmem>>, vector<1x512xf32>
    %5 = vector.broadcast %4 : vector<1x512xf32> to vector<8x512xf32>
    %6 = arith.addf %3, %5 : vector<8x512xf32>
    %cst_5 = arith.constant 0.000000e+00 : f32
    %7 = vector.broadcast %cst_5 : f32 to vector<8x512xf32>
    %8 = arith.maximumf %6, %7 : vector<8x512xf32>
    %9 = arith.truncf %8 : vector<8x512xf32> to vector<8x512xbf16>
    %c0_6 = arith.constant 0 : index
    %c0_7 = arith.constant 0 : index
    %10 = vector.load %arg4[%c0_6, %c0_7] : memref<512x512xbf16, #tpu.memory_space<vmem>>, vector<512x512xbf16>
    %cst_8 = arith.constant dense<0.000000e+00> : vector<8x512xf32>
    %11 = tpu.matmul %9, %10, %cst_8 {dimension_numbers = #tpu.dot_dimension_numbers<[1], [0], [0], [1], [0, 0, 1, 1], [], []>} : vector<8x512xbf16>, vector<512x512xbf16>, vector<8x512xf32> -> vector<8x512xf32>
    %c0_9 = arith.constant 0 : index
    %c0_10 = arith.constant 0 : index
    %12 = vector.load %arg5[%c0_9, %c0_10] : memref<1x512xf32, #tpu.memory_space<vmem>>, vector<1x512xf32>
    %13 = vector.broadcast %12 : vector<1x512xf32> to vector<8x512xf32>
    %14 = arith.addf %11, %13 : vector<8x512xf32>
    %cst_11 = arith.constant 0.000000e+00 : f32
    %15 = vector.broadcast %cst_11 : f32 to vector<8x512xf32>
    %16 = arith.maximumf %14, %15 : vector<8x512xf32>
    %17 = arith.truncf %16 : vector<8x512xf32> to vector<8x512xbf16>
    %c0_12 = arith.constant 0 : index
    %c0_13 = arith.constant 0 : index
    %18 = vector.load %arg6[%c0_12, %c0_13] : memref<512x128xbf16, #tpu.memory_space<vmem>>, vector<512x128xbf16>
    %cst_14 = arith.constant dense<0.000000e+00> : vector<8x128xf32>
    %19 = tpu.matmul %17, %18, %cst_14 {dimension_numbers = #tpu.dot_dimension_numbers<[1], [0], [0], [1], [0, 0, 1, 1], [], []>} : vector<8x512xbf16>, vector<512x128xbf16>, vector<8x128xf32> -> vector<8x128xf32>
    %c0_15 = arith.constant 0 : index
    %c0_16 = arith.constant 0 : index
    %20 = vector.load %arg7[%c0_15, %c0_16] : memref<1x128xf32, #tpu.memory_space<vmem>>, vector<1x128xf32>
    %21 = vector.broadcast %20 : vector<1x128xf32> to vector<8x128xf32>
    %22 = arith.addf %19, %21 : vector<8x128xf32>
    %c0_17 = arith.constant 0 : index
    %c0_18 = arith.constant 0 : index
    %23 = vector.load %arg8[%c0_17, %c0_18] : memref<8x128xf32, #tpu.memory_space<vmem>>, vector<8x128xf32>
    tpu.vector_store %arg8[%c0_17, %c0_18], %22 {strides = array<i32>} : memref<8x128xf32, #tpu.memory_space<vmem>>, vector<8x128xf32>,
    return
  }
  func.func @transform_0(%arg0: i32) -> (i32, i32) {
    %c0_i32 = arith.constant 0 : i32
    %c0_i32_0 = arith.constant 0 : i32
    return %arg0, %c0_i32 : i32, i32
  }
  func.func @transform_1(%arg0: i32) -> (i32, i32) {
    %c0_i32 = arith.constant 0 : i32
    %c0_i32_0 = arith.constant 0 : i32
    %c0_i32_1 = arith.constant 0 : i32
    return %c0_i32, %c0_i32_0 : i32, i32
  }
  func.func @transform_2(%arg0: i32) -> (i32, i32) {
    %c0_i32 = arith.constant 0 : i32
    %c0_i32_0 = arith.constant 0 : i32
    %c0_i32_1 = arith.constant 0 : i32
    return %c0_i32, %c0_i32_0 : i32, i32
  }
  func.func @transform_3(%arg0: i32) -> (i32, i32) {
    %c0_i32 = arith.constant 0 : i32
    %c0_i32_0 = arith.constant 0 : i32
    %c0_i32_1 = arith.constant 0 : i32
    return %c0_i32, %c0_i32_0 : i32, i32
  }
  func.func @transform_4(%arg0: i32) -> (i32, i32) {
    %c0_i32 = arith.constant 0 : i32
    %c0_i32_0 = arith.constant 0 : i32
    %c0_i32_1 = arith.constant 0 : i32
    return %c0_i32, %c0_i32_0 : i32, i32
  }
  func.func @transform_5(%arg0: i32) -> (i32, i32) {
    %c0_i32 = arith.constant 0 : i32
    %c0_i32_0 = arith.constant 0 : i32
    %c0_i32_1 = arith.constant 0 : i32
    return %c0_i32, %c0_i32_0 : i32, i32
  }
  func.func @transform_6(%arg0: i32) -> (i32, i32) {
    %c0_i32 = arith.constant 0 : i32
    %c0_i32_0 = arith.constant 0 : i32
    %c0_i32_1 = arith.constant 0 : i32
    return %c0_i32, %c0_i32_0 : i32, i32
  }
  func.func @transform_7(%arg0: i32) -> (i32, i32) {
    %c0_i32 = arith.constant 0 : i32
    %c0_i32_0 = arith.constant 0 : i32
    return %arg0, %c0_i32 : i32, i32
  }
}

</mosaic_0001>

<llo_original>
// kernel: net_forward.1
$region0: #{net_forward.1}
  #allocation0 [shape = 'u32[]', space=smem, size = 0x4, offset = 0x4, fixed_abs, tag = 'smem constant byte address 0x4 - core index']
  #allocation1 [shape = 'u32[144,128]{1,0:T(1,128)}', space=vmem, size = 0x12000, scoped, tag = 'internal scratch']
  %s0 = inlined_call_operand.vmem [shape: f32[8,256], index: 0, kind: input, shape index: {}]
  %s1 = inlined_call_operand.hbm [shape: bf16[256,512], index: 1, kind: input, shape index: {}]
  %s2 = inlined_call_operand.vmem [shape: f32[1,512], index: 2, kind: input, shape index: {}]
  %s3 = inlined_call_operand.hbm [shape: bf16[512,512], index: 3, kind: input, shape index: {}]
  %s4 = inlined_call_operand.vmem [shape: f32[1,512], index: 4, kind: input, shape index: {}]
  %s5 = inlined_call_operand.hbm [shape: bf16[512,128], index: 5, kind: input, shape index: {}]
  %s6 = inlined_call_operand.vmem [shape: f32[1,128], index: 6, kind: input, shape index: {}]
  %s7 = inlined_call_operand.hbm [shape: f32[8,128], index: 7, kind: output, shape index: {}]
  %s8 = sld [smem:[#allocation0]]
  $region50: #{net_forward.1} parent=0
    _
  %s10 = ssub.s32 1, %s8
  %s11 = scalar_select 0, %s10, %s8
  $region1: #{net_forward.1} parent=0
    #allocation2 [shape = 'u8[262144]{0}', space=vmem, size = 0x40000, scoped, tag = 'input window, operand 1, single buffered']
    #allocation3 [shape = 's32[1]{0}', space=sflag, size = 0x4, scoped, tag = 'scoped memory for net_forward.1']
    #allocation4 [shape = 's32[1]{0}', space=sflag, size = 0x4, scoped, tag = 'scoped memory for net_forward.1']
    #allocation5 [shape = 'u8[524288]{0}', space=vmem, size = 0x80000, scoped, tag = 'input window, operand 3, single buffered']
    #allocation6 [shape = 's32[1]{0}', space=sflag, size = 0x4, scoped, tag = 'scoped memory for net_forward.1']
    #allocation7 [shape = 'u8[131072]{0}', space=vmem, size = 0x20000, scoped, tag = 'input window, operand 5, single buffered']
    #allocation8 [shape = 'u8[4096]{0}', space=vmem, size = 0x1000, scoped, tag = 'output window, operand 0, single buffered']
    %12 = vsyncpa [#allocation3], 0
    %13 = vsyncpa [#allocation6], 0
    %14 = vsyncpa [#allocation4], 0
    // Predicated region
    $region2: #{net_forward.1} parent=1 // pred_check
      _
    $region3: #{net_forward.1} parent=1 // pred_check_branch
      %16 = sbr.rel (0) target = $region5
    $region4: #{net_forward.1} parent=1 // pred_region
      _
    $region5: #{net_forward.1} parent=1 // pred_fallthru
      _
    // Predicated region
    $region6: #{net_forward.1} parent=1 // pred_check
      _
    $region7: #{net_forward.1} parent=1 // pred_check_branch
      %18 = sbr.rel (0) target = $region9
    $region8: #{net_forward.1} parent=1 // pred_region
      %s20 = ssub.s32 8192, 8192
      %21 = vsyncadd [#allocation3], %s20
      %s22 = sshll.u32 [#allocation2], 4
      %s23 = int_to_ptr.vmem [resolvable:$true] %s22
      %28 = dma.hbm_to_vmem [thread:$0]  %s1, 8192, %s23, [#allocation3], 256, 256, 16
    $region9: #{net_forward.1} parent=1 // pred_fallthru
      _
    // Predicated region
    $region10: #{net_forward.1} parent=1 // pred_check
      _
    $region11: #{net_forward.1} parent=1 // pred_check_branch
      %30 = sbr.rel (0) target = $region13
    $region12: #{net_forward.1} parent=1 // pred_region
      _
    $region13: #{net_forward.1} parent=1 // pred_fallthru
      _
    // Predicated region
    $region14: #{net_forward.1} parent=1 // pred_check
      _
    $region15: #{net_forward.1} parent=1 // pred_check_branch
      %32 = sbr.rel (0) target = $region17
    $region16: #{net_forward.1} parent=1 // pred_region
      %s34 = ssub.s32 16384, 16384
      %35 = vsyncadd [#allocation6], %s34
      %s36 = sshll.u32 [#allocation5], 4
      %s37 = int_to_ptr.vmem [resolvable:$true] %s36
      %42 = dma.hbm_to_vmem [thread:$0]  %s3, 16384, %s37, [#allocation6], 256, 256, 16
    $region17: #{net_forward.1} parent=1 // pred_fallthru
      _
    // Predicated region
    $region18: #{net_forward.1} parent=1 // pred_check
      _
    $region19: #{net_forward.1} parent=1 // pred_check_branch
      %44 = sbr.rel (0) target = $region21
    $region20: #{net_forward.1} parent=1 // pred_region
      _
    $region21: #{net_forward.1} parent=1 // pred_fallthru
      _
    // Predicated region
    $region22: #{net_forward.1} parent=1 // pred_check
      _
    $region23: #{net_forward.1} parent=1 // pred_check_branch
      %46 = sbr.rel (0) target = $region25
    $region24: #{net_forward.1} parent=1 // pred_region
      %s48 = ssub.s32 4096, 4096
      %49 = vsyncadd [#allocation6], %s48
      %s50 = sshll.u32 [#allocation7], 4
      %s51 = int_to_ptr.vmem [resolvable:$true] %s50
      %56 = dma.hbm_to_vmem [thread:$0]  %s5, 4096, %s51, [#allocation6], 64, 64, 4
    $region25: #{net_forward.1} parent=1 // pred_fallthru
      _
    // Predicated region
    $region26: #{net_forward.1} parent=1 // pred_check
      _
    $region27: #{net_forward.1} parent=1 // pred_check_branch
      %58 = sbr.rel (0) target = $region29
    $region28: #{net_forward.1} parent=1 // pred_region
      _
    $region29: #{net_forward.1} parent=1 // pred_fallthru
      _
    // Predicated region
    $region30: #{net_forward.1} parent=1 // pred_check
      _
    $region31: #{net_forward.1} parent=1 // pred_check_branch
      %60 = sbr.rel (0) target = $region33
    $region32: #{net_forward.1} parent=1 // pred_region
      %61 = dma.done [#allocation3], 8192
    $region33: #{net_forward.1} parent=1 // pred_fallthru
      _
    // Predicated region
    $region34: #{net_forward.1} parent=1 // pred_check
      _
    $region35: #{net_forward.1} parent=1 // pred_check_branch
      %63 = sbr.rel (0) target = $region37
    $region36: #{net_forward.1} parent=1 // pred_region
      %64 = dma.done [#allocation6], 16384
    $region37: #{net_forward.1} parent=1 // pred_fallthru
      _
    // Predicated region
    $region38: #{net_forward.1} parent=1 // pred_check
      _
    $region39: #{net_forward.1} parent=1 // pred_check_branch
      %66 = sbr.rel (0) target = $region41
    $region40: #{net_forward.1} parent=1 // pred_region
      %67 = dma.done [#allocation6], 4096
    $region41: #{net_forward.1} parent=1 // pred_fallthru
      _
    %v69 = vld [vmem:[%s0] sm:$0xff]
    %v70 = vld [vmem:[%s0 + $0x8] sm:$0xff]
    %v71 = vpack.c.bf16 %v69, %v69
    %v72 = vpack.c.bf16 %v70, %v70
    %v73 = vld [vmem:[#allocation2] sm:$0xff]
    %v74 = vld [vmem:[#allocation2 + $0x8] sm:$0xff]
    %v75 = vld [vmem:[#allocation2 + $0x10] sm:$0xff]
    %v76 = vld [vmem:[#allocation2 + $0x18] sm:$0xff]
    %v77 = vld [vmem:[#allocation2 + $0x20] sm:$0xff]
    %v78 = vld [vmem:[#allocation2 + $0x28] sm:$0xff]
    %v79 = vld [vmem:[#allocation2 + $0x30] sm:$0xff]
    %v80 = vld [vmem:[#allocation2 + $0x38] sm:$0xff]
    %v81 = vld [vmem:[#allocation2 + $0x40] sm:$0xff]
    %v82 = vld [vmem:[#allocation2 + $0x48] sm:$0xff]
    %v83 = vld [vmem:[#allocation2 + $0x50] sm:$0xff]
    %v84 = vld [vmem:[#allocation2 + $0x58] sm:$0xff]
    %v85 = vld [vmem:[#allocation2 + $0x60] sm:$0xff]
    %v86 = vld [vmem:[#allocation2 + $0x68] sm:$0xff]
    %v87 = vld [vmem:[#allocation2 + $0x70] sm:$0xff]
    %v88 = vld [vmem:[#allocation2 + $0x78] sm:$0xff]
    %v89 = vld [vmem:[#allocation2 + $0x80] sm:$0xff]
    %v90 = vld [vmem:[#allocation2 + $0x88] sm:$0xff]
    %v91 = vld [vmem:[#allocation2 + $0x90] sm:$0xff]
    %v92 = vld [vmem:[#allocation2 + $0x98] sm:$0xff]
    %v93 = vld [vmem:[#allocation2 + $0xa0] sm:$0xff]
    %v94 = vld [vmem:[#allocation2 + $0xa8] sm:$0xff]
    %v95 = vld [vmem:[#allocation2 + $0xb0] sm:$0xff]
    %v96 = vld [vmem:[#allocation2 + $0xb8] sm:$0xff]
    %v97 = vld [vmem:[#allocation2 + $0xc0] sm:$0xff]
    %v98 = vld [vmem:[#allocation2 + $0xc8] sm:$0xff]
    %v99 = vld [vmem:[#allocation2 + $0xd0] sm:$0xff]
    %v100 = vld [vmem:[#allocation2 + $0xd8] sm:$0xff]
    %v101 = vld [vmem:[#allocation2 + $0xe0] sm:$0xff]
    %v102 = vld [vmem:[#allocation2 + $0xe8] sm:$0xff]
    %v103 = vld [vmem:[#allocation2 + $0xf0] sm:$0xff]
    %v104 = vld [vmem:[#allocation2 + $0xf8] sm:$0xff]
    %v105 = vld [vmem:[#allocation2 + $0x100] sm:$0xff]
    %v106 = vld [vmem:[#allocation2 + $0x108] sm:$0xff]
    %v107 = vld [vmem:[#allocation2 + $0x110] sm:$0xff]
    %v108 = vld [vmem:[#allocation2 + $0x118] sm:$0xff]
    %v109 = vld [vmem:[#allocation2 + $0x120] sm:$0xff]
    %v110 = vld [vmem:[#allocation2 + $0x128] sm:$0xff]
    %v111 = vld [vmem:[#allocation2 + $0x130] sm:$0xff]
    %v112 = vld [vmem:[#allocation2 + $0x138] sm:$0xff]
    %v113 = vld [vmem:[#allocation2 + $0x140] sm:$0xff]
    %v114 = vld [vmem:[#allocation2 + $0x148] sm:$0xff]
    %v115 = vld [vmem:[#allocation2 + $0x150] sm:$0xff]
    %v116 = vld [vmem:[#allocation2 + $0x158] sm:$0xff]
    %v117 = vld [vmem:[#allocation2 + $0x160] sm:$0xff]
    %v118 = vld [vmem:[#allocation2 + $0x168] sm:$0xff]
    %v119 = vld [vmem:[#allocation2 + $0x170] sm:$0xff]
    %v120 = vld [vmem:[#allocation2 + $0x178] sm:$0xff]
    %v121 = vld [vmem:[#allocation2 + $0x180] sm:$0xff]
    %v122 = vld [vmem:[#allocation2 + $0x188] sm:$0xff]
    %v123 = vld [vmem:[#allocation2 + $0x190] sm:$0xff]
    %v124 = vld [vmem:[#allocation2 + $0x198] sm:$0xff]
    %v125 = vld [vmem:[#allocation2 + $0x1a0] sm:$0xff]
    %v126 = vld [vmem:[#allocation2 + $0x1a8] sm:$0xff]
    %v127 = vld [vmem:[#allocation2 + $0x1b0] sm:$0xff]
    %v128 = vld [vmem:[#allocation2 + $0x1b8] sm:$0xff]
    %v129 = vld [vmem:[#allocation2 + $0x1c0] sm:$0xff]
    %v130 = vld [vmem:[#allocation2 + $0x1c8] sm:$0xff]
    %v131 = vld [vmem:[#allocation2 + $0x1d0] sm:$0xff]
    %v132 = vld [vmem:[#allocation2 + $0x1d8] sm:$0xff]
    %v133 = vld [vmem:[#allocation2 + $0x1e0] sm:$0xff]
    %v134 = vld [vmem:[#allocation2 + $0x1e8] sm:$0xff]
    %v135 = vld [vmem:[#allocation2 + $0x1f0] sm:$0xff]
    %v136 = vld [vmem:[#allocation2 + $0x1f8] sm:$0xff]
    %v137 = vld [vmem:[%s2] sm:$0xf]
    %v139 = vlaneseq
    %v140 = vshrl.u32 %v139, 7
    %v141 = vsub.s32 0, %v140
    %v142 = vrot.slane %v137, %v141
    %v143 = vlaneseq
    %v144 = vshrl.u32 %v143, 7
    %v145 = vsub.s32 1, %v144
    %v146 = vrot.slane %v137, %v145
    %v147 = vlaneseq
    %v148 = vshrl.u32 %v147, 7
    %v149 = vsub.s32 2, %v148
    %v150 = vrot.slane %v137, %v149
    %v151 = vlaneseq
    %v152 = vshrl.u32 %v151, 7
    %v153 = vsub.s32 3, %v152
    %v154 = vrot.slane %v137, %v153
    %v223 = vunpack.c.l.b16 %v73
    %v224 = vunpack.c.h.b16 %v73
    %v225 = vunpack.c.l.b16 %v74
    %v226 = vunpack.c.h.b16 %v74
    %v227 = vunpack.c.l.b16 %v75
    %v228 = vunpack.c.h.b16 %v75
    %v229 = vunpack.c.l.b16 %v76
    %v230 = vunpack.c.h.b16 %v76
    %v231 = vunpack.c.l.b16 %v77
    %v232 = vunpack.c.h.b16 %v77
    %v233 = vunpack.c.l.b16 %v78
    %v234 = vunpack.c.h.b16 %v78
    %v235 = vunpack.c.l.b16 %v79
    %v236 = vunpack.c.h.b16 %v79
    %v237 = vunpack.c.l.b16 %v80
    %v238 = vunpack.c.h.b16 %v80
    %v239 = vunpack.c.l.b16 %v81
    %v240 = vunpack.c.h.b16 %v81
    %v241 = vunpack.c.l.b16 %v82
    %v242 = vunpack.c.h.b16 %v82
    %v243 = vunpack.c.l.b16 %v83
    %v244 = vunpack.c.h.b16 %v83
    %v245 = vunpack.c.l.b16 %v84
    %v246 = vunpack.c.h.b16 %v84
    %v247 = vunpack.c.l.b16 %v85
    %v248 = vunpack.c.h.b16 %v85
    %v249 = vunpack.c.l.b16 %v86
    %v250 = vunpack.c.h.b16 %v86
    %v251 = vunpack.c.l.b16 %v87
    %v252 = vunpack.c.h.b16 %v87
    %v253 = vunpack.c.l.b16 %v88
    %v254 = vunpack.c.h.b16 %v88
    %v255 = vunpack.c.l.b16 %v89
    %v256 = vunpack.c.h.b16 %v89
    %v257 = vunpack.c.l.b16 %v90
    %v258 = vunpack.c.h.b16 %v90
    %v259 = vunpack.c.l.b16 %v91
    %v260 = vunpack.c.h.b16 %v91
    %v261 = vunpack.c.l.b16 %v92
    %v262 = vunpack.c.h.b16 %v92
    %v263 = vunpack.c.l.b16 %v93
    %v264 = vunpack.c.h.b16 %v93
    %v265 = vunpack.c.l.b16 %v94
    %v266 = vunpack.c.h.b16 %v94
    %v267 = vunpack.c.l.b16 %v95
    %v268 = vunpack.c.h.b16 %v95
    %v269 = vunpack.c.l.b16 %v96
    %v270 = vunpack.c.h.b16 %v96
    %v271 = vunpack.c.l.b16 %v97
    %v272 = vunpack.c.h.b16 %v97
    %v273 = vunpack.c.l.b16 %v98
    %v274 = vunpack.c.h.b16 %v98
    %v275 = vunpack.c.l.b16 %v99
    %v276 = vunpack.c.h.b16 %v99
    %v277 = vunpack.c.l.b16 %v100
    %v278 = vunpack.c.h.b16 %v100
    %v279 = vunpack.c.l.b16 %v101
    %v280 = vunpack.c.h.b16 %v101
    %v281 = vunpack.c.l.b16 %v102
    %v282 = vunpack.c.h.b16 %v102
    %v283 = vunpack.c.l.b16 %v103
    %v284 = vunpack.c.h.b16 %v103
    %v285 = vunpack.c.l.b16 %v104
    %v286 = vunpack.c.h.b16 %v104
    %v287 = vunpack.c.l.b16 %v105
    %v288 = vunpack.c.h.b16 %v105
    %v289 = vunpack.c.l.b16 %v106
    %v290 = vunpack.c.h.b16 %v106
    %v291 = vunpack.c.l.b16 %v107
    %v292 = vunpack.c.h.b16 %v107
    %v293 = vunpack.c.l.b16 %v108
    %v294 = vunpack.c.h.b16 %v108
    %v295 = vunpack.c.l.b16 %v109
    %v296 = vunpack.c.h.b16 %v109
    %v297 = vunpack.c.l.b16 %v110
    %v298 = vunpack.c.h.b16 %v110
    %v299 = vunpack.c.l.b16 %v111
    %v300 = vunpack.c.h.b16 %v111
    %v301 = vunpack.c.l.b16 %v112
    %v302 = vunpack.c.h.b16 %v112
    %v303 = vunpack.c.l.b16 %v113
    %v304 = vunpack.c.h.b16 %v113
    %v305 = vunpack.c.l.b16 %v114
    %v306 = vunpack.c.h.b16 %v114
    %v307 = vunpack.c.l.b16 %v115
    %v308 = vunpack.c.h.b16 %v115
    %v309 = vunpack.c.l.b16 %v116
    %v310 = vunpack.c.h.b16 %v116
    %v311 = vunpack.c.l.b16 %v117
    %v312 = vunpack.c.h.b16 %v117
    %v313 = vunpack.c.l.b16 %v118
    %v314 = vunpack.c.h.b16 %v118
    %v315 = vunpack.c.l.b16 %v119
    %v316 = vunpack.c.h.b16 %v119
    %v317 = vunpack.c.l.b16 %v120
    %v318 = vunpack.c.h.b16 %v120
    %v319 = vunpack.c.l.b16 %v121
    %v320 = vunpack.c.h.b16 %v121
    %v321 = vunpack.c.l.b16 %v122
    %v322 = vunpack.c.h.b16 %v122
    %v323 = vunpack.c.l.b16 %v123
    %v324 = vunpack.c.h.b16 %v123
    %v325 = vunpack.c.l.b16 %v124
    %v326 = vunpack.c.h.b16 %v124
    %v327 = vunpack.c.l.b16 %v125
    %v328 = vunpack.c.h.b16 %v125
    %v329 = vunpack.c.l.b16 %v126
    %v330 = vunpack.c.h.b16 %v126
    %v331 = vunpack.c.l.b16 %v127
    %v332 = vunpack.c.h.b16 %v127
    %v333 = vunpack.c.l.b16 %v128
    %v334 = vunpack.c.h.b16 %v128
    %v335 = vunpack.c.l.b16 %v129
    %v336 = vunpack.c.h.b16 %v129
    %v337 = vunpack.c.l.b16 %v130
    %v338 = vunpack.c.h.b16 %v130
    %v339 = vunpack.c.l.b16 %v131
    %v340 = vunpack.c.h.b16 %v131
    %v341 = vunpack.c.l.b16 %v132
    %v342 = vunpack.c.h.b16 %v132
    %v343 = vunpack.c.l.b16 %v133
    %v344 = vunpack.c.h.b16 %v133
    %v345 = vunpack.c.l.b16 %v134
    %v346 = vunpack.c.h.b16 %v134
    %v347 = vunpack.c.l.b16 %v135
    %v348 = vunpack.c.h.b16 %v135
    %v349 = vunpack.c.l.b16 %v136
    %v350 = vunpack.c.h.b16 %v136
    %v351 = vpack.c.b16 %v227, %v223
    %v352 = vpack.c.b16 %v228, %v224
    %v353 = vpack.c.b16 %v229, %v225
    %v354 = vpack.c.b16 %v230, %v226
    %v355 = vpack.c.b16 %v235, %v231
    %v356 = vpack.c.b16 %v236, %v232
    %v357 = vpack.c.b16 %v237, %v233
    %v358 = vpack.c.b16 %v238, %v234
    %v359 = vpack.c.b16 %v243, %v239
    %v360 = vpack.c.b16 %v244, %v240
    %v361 = vpack.c.b16 %v245, %v241
    %v362 = vpack.c.b16 %v246, %v242
    %v363 = vpack.c.b16 %v251, %v247
    %v364 = vpack.c.b16 %v252, %v248
    %v365 = vpack.c.b16 %v253, %v249
    %v366 = vpack.c.b16 %v254, %v250
    %v367 = vpack.c.b16 %v259, %v255
    %v368 = vpack.c.b16 %v260, %v256
    %v369 = vpack.c.b16 %v261, %v257
    %v370 = vpack.c.b16 %v262, %v258
    %v371 = vpack.c.b16 %v267, %v263
    %v372 = vpack.c.b16 %v268, %v264
    %v373 = vpack.c.b16 %v269, %v265
    %v374 = vpack.c.b16 %v270, %v266
    %v375 = vpack.c.b16 %v275, %v271
    %v376 = vpack.c.b16 %v276, %v272
    %v377 = vpack.c.b16 %v277, %v273
    %v378 = vpack.c.b16 %v278, %v274
    %v379 = vpack.c.b16 %v283, %v279
    %v380 = vpack.c.b16 %v284, %v280
    %v381 = vpack.c.b16 %v285, %v281
    %v382 = vpack.c.b16 %v286, %v282
    %v383 = vpack.c.b16 %v291, %v287
    %v384 = vpack.c.b16 %v292, %v288
    %v385 = vpack.c.b16 %v293, %v289
    %v386 = vpack.c.b16 %v294, %v290
    %v387 = vpack.c.b16 %v299, %v295
    %v388 = vpack.c.b16 %v300, %v296
    %v389 = vpack.c.b16 %v301, %v297
    %v390 = vpack.c.b16 %v302, %v298
    %v391 = vpack.c.b16 %v307, %v303
    %v392 = vpack.c.b16 %v308, %v304
    %v393 = vpack.c.b16 %v309, %v305
    %v394 = vpack.c.b16 %v310, %v306
    %v395 = vpack.c.b16 %v315, %v311
    %v396 = vpack.c.b16 %v316, %v312
    %v397 = vpack.c.b16 %v317, %v313
    %v398 = vpack.c.b16 %v318, %v314
    %v399 = vpack.c.b16 %v323, %v319
    %v400 = vpack.c.b16 %v324, %v320
    %v401 = vpack.c.b16 %v325, %v321
    %v402 = vpack.c.b16 %v326, %v322
    %v403 = vpack.c.b16 %v331, %v327
    %v404 = vpack.c.b16 %v332, %v328
    %v405 = vpack.c.b16 %v333, %v329
    %v406 = vpack.c.b16 %v334, %v330
    %v407 = vpack.c.b16 %v339, %v335
    %v408 = vpack.c.b16 %v340, %v336
    %v409 = vpack.c.b16 %v341, %v337
    %v410 = vpack.c.b16 %v342, %v338
    %v411 = vpack.c.b16 %v347, %v343
    %v412 = vpack.c.b16 %v348, %v344
    %v413 = vpack.c.b16 %v349, %v345
    %v414 = vpack.c.b16 %v350, %v346
    %479 = vmatprep.subr.bf16.mxu0 %v380
    %480 = vmatpush1.bf16.msra.mxu0 %v379
    %481 = vmatprep.subr.bf16.mxu0 %v376
    %482 = vmatpush1.bf16.msra.mxu0 %v375
    %483 = vmatprep.subr.bf16.mxu0 %v372
    %484 = vmatpush1.bf16.msra.mxu0 %v371
    %485 = vmatprep.subr.bf16.mxu0 %v368
    %486 = vmatpush1.bf16.msra.mxu0 %v367
    %487 = vmatprep.subr.bf16.mxu0 %v364
    %488 = vmatpush1.bf16.msra.mxu0 %v363
    %489 = vmatprep.subr.bf16.mxu0 %v360
    %490 = vmatpush1.bf16.msra.mxu0 %v359
    %491 = vmatprep.subr.bf16.mxu0 %v356
    %492 = vmatpush1.bf16.msra.mxu0 %v355
    %493 = vmatprep.subr.bf16.mxu0 %v352
    %494 = vmatpush1.bf16.msra.mxu0 %v351
    %495 = vmatprep.subr.bf16.mxu0 %v412
    %496 = vmatpush2.bf16.msra.mxu0 %v411
    %497 = vmatprep.subr.bf16.mxu0 %v408
    %498 = vmatpush2.bf16.msra.mxu0 %v407
    %499 = vmatprep.subr.bf16.mxu0 %v404
    %500 = vmatpush2.bf16.msra.mxu0 %v403
    %501 = vmatprep.subr.bf16.mxu0 %v400
    %502 = vmatpush2.bf16.msra.mxu0 %v399
    %503 = vmatprep.subr.bf16.mxu0 %v396
    %504 = vmatpush2.bf16.msra.mxu0 %v395
    %505 = vmatprep.subr.bf16.mxu0 %v392
    %506 = vmatpush2.bf16.msra.mxu0 %v391
    %507 = vmatprep.subr.bf16.mxu0 %v388
    %508 = vmatpush2.bf16.msra.mxu0 %v387
    %509 = vmatprep.subr.bf16.mxu0 %v384
    %510 = vmatpush2.bf16.msra.mxu0 %v383
    %511 = vmatprep.mubr.bf16.mxu0 %v72
    %512 = vmatmul.mubr.bf16.gmra.mxu0 %v71
    %v513 = vpop.f32.mrf.mxu0
    %v514 = vadd.f32 %v142, %v513
    %v515 = vpop.f32.mrf.mxu0
    %v516 = vadd.f32 %v146, %v515
    %v517 = vpop.f32.mrf.mxu0
    %v518 = vpop.f32.mrf.mxu0
    %519 = vdwg.mxu0
    %520 = vmatprep.subr.bf16.mxu0 %v382
    %521 = vmatpush1.bf16.msra.mxu0 %v381
    %522 = vmatprep.subr.bf16.mxu0 %v378
    %523 = vmatpush1.bf16.msra.mxu0 %v377
    %524 = vmatprep.subr.bf16.mxu0 %v374
    %525 = vmatpush1.bf16.msra.mxu0 %v373
    %526 = vmatprep.subr.bf16.mxu0 %v370
    %527 = vmatpush1.bf16.msra.mxu0 %v369
    %528 = vmatprep.subr.bf16.mxu0 %v366
    %529 = vmatpush1.bf16.msra.mxu0 %v365
    %530 = vmatprep.subr.bf16.mxu0 %v362
    %531 = vmatpush1.bf16.msra.mxu0 %v361
    %532 = vmatprep.subr.bf16.mxu0 %v358
    %533 = vmatpush1.bf16.msra.mxu0 %v357
    %534 = vmatprep.subr.bf16.mxu0 %v354
    %535 = vmatpush1.bf16.msra.mxu0 %v353
    %536 = vmatprep.subr.bf16.mxu0 %v414
    %537 = vmatpush2.bf16.msra.mxu0 %v413
    %538 = vmatprep.subr.bf16.mxu0 %v410
    %539 = vmatpush2.bf16.msra.mxu0 %v409
    %540 = vmatprep.subr.bf16.mxu0 %v406
    %541 = vmatpush2.bf16.msra.mxu0 %v405
    %542 = vmatprep.subr.bf16.mxu0 %v402
    %543 = vmatpush2.bf16.msra.mxu0 %v401
    %544 = vmatprep.subr.bf16.mxu0 %v398
    %545 = vmatpush2.bf16.msra.mxu0 %v397
    %546 = vmatprep.subr.bf16.mxu0 %v394
    %547 = vmatpush2.bf16.msra.mxu0 %v393
    %548 = vmatprep.subr.bf16.mxu0 %v390
    %549 = vmatpush2.bf16.msra.mxu0 %v389
    %550 = vmatprep.subr.bf16.mxu0 %v386
    %551 = vmatpush2.bf16.msra.mxu0 %v385
    %552 = vmatprep.mubr.bf16.mxu0 %v72
    %553 = vmatmul.mubr.bf16.gmra.mxu0 %v71
    %v554 = vpop.f32.mrf.mxu0
    %v555 = vadd.f32 %v150, %v554
    %v556 = vpop.f32.mrf.mxu0
    %v557 = vadd.f32 %v154, %v556
    %v558 = vpop.f32.mrf.mxu0
    %v559 = vpop.f32.mrf.mxu0
    %560 = vdwg.mxu0
    %v561 = vmax.f32 %v514, 0.0
    %v562 = vmax.f32 %v516, 0.0
    %v563 = vmax.f32 %v555, 0.0
    %v564 = vmax.f32 %v557, 0.0
    %v565 = vpack.c.bf16 %v561, %v561
    %v566 = vpack.c.bf16 %v562, %v562
    %v567 = vpack.c.bf16 %v563, %v563
    %v568 = vpack.c.bf16 %v564, %v564
    %v569 = vld [vmem:[#allocation5] sm:$0xff]
    %v570 = vld [vmem:[#allocation5 + $0x8] sm:$0xff]
    %v571 = vld [vmem:[#allocation5 + $0x10] sm:$0xff]
    %v572 = vld [vmem:[#allocation5 + $0x18] sm:$0xff]
    %v573 = vld [vmem:[#allocation5 + $0x20] sm:$0xff]
    %v574 = vld [vmem:[#allocation5 + $0x28] sm:$0xff]
    %v575 = vld [vmem:[#allocation5 + $0x30] sm:$0xff]
    %v576 = vld [vmem:[#allocation5 + $0x38] sm:$0xff]
    %v577 = vld [vmem:[#allocation5 + $0x40] sm:$0xff]
    %v578 = vld [vmem:[#allocation5 + $0x48] sm:$0xff]
    %v579 = vld [vmem:[#allocation5 + $0x50] sm:$0xff]
    %v580 = vld [vmem:[#allocation5 + $0x58] sm:$0xff]
    %v581 = vld [vmem:[#allocation5 + $0x60] sm:$0xff]
    %v582 = vld [vmem:[#allocation5 + $0x68] sm:$0xff]
    %v583 = vld [vmem:[#allocation5 + $0x70] sm:$0xff]
    %v584 = vld [vmem:[#allocation5 + $0x78] sm:$0xff]
    %v585 = vld [vmem:[#allocation5 + $0x80] sm:$0xff]
    %v586 = vld [vmem:[#allocation5 + $0x88] sm:$0xff]
    %v587 = vld [vmem:[#allocation5 + $0x90] sm:$0xff]
    %v588 = vld [vmem:[#allocation5 + $0x98] sm:$0xff]
    %v589 = vld [vmem:[#allocation5 + $0xa0] sm:$0xff]
    %v590 = vld [vmem:[#allocation5 + $0xa8] sm:$0xff]
    %v591 = vld [vmem:[#allocation5 + $0xb0] sm:$0xff]
    %v592 = vld [vmem:[#allocation5 + $0xb8] sm:$0xff]
    %v593 = vld [vmem:[#allocation5 + $0xc0] sm:$0xff]
    %v594 = vld [vmem:[#allocation5 + $0xc8] sm:$0xff]
    %v595 = vld [vmem:[#allocation5 + $0xd0] sm:$0xff]
    %v596 = vld [vmem:[#allocation5 + $0xd8] sm:$0xff]
    %v597 = vld [vmem:[#allocation5 + $0xe0] sm:$0xff]
    %v598 = vld [vmem:[#allocation5 + $0xe8] sm:$0xff]
    %v599 = vld [vmem:[#allocation5 + $0xf0] sm:$0xff]
    %v600 = vld [vmem:[#allocation5 + $0xf8] sm:$0xff]
    %v601 = vld [vmem:[#allocation5 + $0x100] sm:$0xff]
    %v602 = vld [vmem:[#allocation5 + $0x108] sm:$0xff]
    %v603 = vld [vmem:[#allocation5 + $0x110] sm:$0xff]
    %v604 = vld [vmem:[#allocation5 + $0x118] sm:$0xff]
    %v605 = vld [vmem:[#allocation5 + $0x120] sm:$0xff]
    %v606 = vld [vmem:[#allocation5 + $0x128] sm:$0xff]
    %v607 = vld [vmem:[#allocation5 + $0x130] sm:$0xff]
    %v608 = vld [vmem:[#allocation5 + $0x138] sm:$0xff]
    %v609 = vld [vmem:[#allocation5 + $0x140] sm:$0xff]
    %v610 = vld [vmem:[#allocation5 + $0x148] sm:$0xff]
    %v611 = vld [vmem:[#allocation5 + $0x150] sm:$0xff]
    %v612 = vld [vmem:[#allocation5 + $0x158] sm:$0xff]
    %v613 = vld [vmem:[#allocation5 + $0x160] sm:$0xff]
    %v614 = vld [vmem:[#allocation5 + $0x168] sm:$0xff]
    %v615 = vld [vmem:[#allocation5 + $0x170] sm:$0xff]
    %v616 = vld [vmem:[#allocation5 + $0x178] sm:$0xff]
    %v617 = vld [vmem:[#allocation5 + $0x180] sm:$0xff]
    %v618 = vld [vmem:[#allocation5 + $0x188] sm:$0xff]
    %v619 = vld [vmem:[#allocation5 + $0x190] sm:$0xff]
    %v620 = vld [vmem:[#allocation5 + $0x198] sm:$0xff]
    %v621 = vld [vmem:[#allocation5 + $0x1a0] sm:$0xff]
    %v622 = vld [vmem:[#allocation5 + $0x1a8] sm:$0xff]
    %v623 = vld [vmem:[#allocation5 + $0x1b0] sm:$0xff]
    %v624 = vld [vmem:[#allocation5 + $0x1b8] sm:$0xff]
    %v625 = vld [vmem:[#allocation5 + $0x1c0] sm:$0xff]
    %v626 = vld [vmem:[#allocation5 + $0x1c8] sm:$0xff]
    %v627 = vld [vmem:[#allocation5 + $0x1d0] sm:$0xff]
    %v628 = vld [vmem:[#allocation5 + $0x1d8] sm:$0xff]
    %v629 = vld [vmem:[#allocation5 + $0x1e0] sm:$0xff]
    %v630 = vld [vmem:[#allocation5 + $0x1e8] sm:$0xff]
    %v631 = vld [vmem:[#allocation5 + $0x1f0] sm:$0xff]
    %v632 = vld [vmem:[#allocation5 + $0x1f8] sm:$0xff]
    %v633 = vld [vmem:[#allocation5 + $0x200] sm:$0xff]
    %v634 = vld [vmem:[#allocation5 + $0x208] sm:$0xff]
    %v635 = vld [vmem:[#allocation5 + $0x210] sm:$0xff]
    %v636 = vld [vmem:[#allocation5 + $0x218] sm:$0xff]
    %v637 = vld [vmem:[#allocation5 + $0x220] sm:$0xff]
    %v638 = vld [vmem:[#allocation5 + $0x228] sm:$0xff]
    %v639 = vld [vmem:[#allocation5 + $0x230] sm:$0xff]
    %v640 = vld [vmem:[#allocation5 + $0x238] sm:$0xff]
    %v641 = vld [vmem:[#allocation5 + $0x240] sm:$0xff]
    %v642 = vld [vmem:[#allocation5 + $0x248] sm:$0xff]
    %v643 = vld [vmem:[#allocation5 + $0x250] sm:$0xff]
    %v644 = vld [vmem:[#allocation5 + $0x258] sm:$0xff]
    %v645 = vld [vmem:[#allocation5 + $0x260] sm:$0xff]
    %v646 = vld [vmem:[#allocation5 + $0x268] sm:$0xff]
    %v647 = vld [vmem:[#allocation5 + $0x270] sm:$0xff]
    %v648 = vld [vmem:[#allocation5 + $0x278] sm:$0xff]
    %v649 = vld [vmem:[#allocation5 + $0x280] sm:$0xff]
    %v650 = vld [vmem:[#allocation5 + $0x288] sm:$0xff]
    %v651 = vld [vmem:[#allocation5 + $0x290] sm:$0xff]
    %v652 = vld [vmem:[#allocation5 + $0x298] sm:$0xff]
    %v653 = vld [vmem:[#allocation5 + $0x2a0] sm:$0xff]
    %v654 = vld [vmem:[#allocation5 + $0x2a8] sm:$0xff]
    %v655 = vld [vmem:[#allocation5 + $0x2b0] sm:$0xff]
    %v656 = vld [vmem:[#allocation5 + $0x2b8] sm:$0xff]
    %v657 = vld [vmem:[#allocation5 + $0x2c0] sm:$0xff]
    %v658 = vld [vmem:[#allocation5 + $0x2c8] sm:$0xff]
    %v659 = vld [vmem:[#allocation5 + $0x2d0] sm:$0xff]
    %v660 = vld [vmem:[#allocation5 + $0x2d8] sm:$0xff]
    %v661 = vld [vmem:[#allocation5 + $0x2e0] sm:$0xff]
    %v662 = vld [vmem:[#allocation5 + $0x2e8] sm:$0xff]
    %v663 = vld [vmem:[#allocation5 + $0x2f0] sm:$0xff]
    %v664 = vld [vmem:[#allocation5 + $0x2f8] sm:$0xff]
    %v665 = vld [vmem:[#allocation5 + $0x300] sm:$0xff]
    %v666 = vld [vmem:[#allocation5 + $0x308] sm:$0xff]
    %v667 = vld [vmem:[#allocation5 + $0x310] sm:$0xff]
    %v668 = vld [vmem:[#allocation5 + $0x318] sm:$0xff]
    %v669 = vld [vmem:[#allocation5 + $0x320] sm:$0xff]
    %v670 = vld [vmem:[#allocation5 + $0x328] sm:$0xff]
    %v671 = vld [vmem:[#allocation5 + $0x330] sm:$0xff]
    %v672 = vld [vmem:[#allocation5 + $0x338] sm:$0xff]
    %v673 = vld [vmem:[#allocation5 + $0x340] sm:$0xff]
    %v674 = vld [vmem:[#allocation5 + $0x348] sm:$0xff]
    %v675 = vld [vmem:[#allocation5 + $0x350] sm:$0xff]
    %v676 = vld [vmem:[#allocation5 + $0x358] sm:$0xff]
    %v677 = vld [vmem:[#allocation5 + $0x360] sm:$0xff]
    %v678 = vld [vmem:[#allocation5 + $0x368] sm:$0xff]
    %v679 = vld [vmem:[#allocation5 + $0x370] sm:$0xff]
    %v680 = vld [vmem:[#allocation5 + $0x378] sm:$0xff]
    %v681 = vld [vmem:[#allocation5 + $0x380] sm:$0xff]
    %v682 = vld [vmem:[#allocation5 + $0x388] sm:$0xff]
    %v683 = vld [vmem:[#allocation5 + $0x390] sm:$0xff]
    %v684 = vld [vmem:[#allocation5 + $0x398] sm:$0xff]
    %v685 = vld [vmem:[#allocation5 + $0x3a0] sm:$0xff]
    %v686 = vld [vmem:[#allocation5 + $0x3a8] sm:$0xff]
    %v687 = vld [vmem:[#allocation5 + $0x3b0] sm:$0xff]
    %v688 = vld [vmem:[#allocation5 + $0x3b8] sm:$0xff]
    %v689 = vld [vmem:[#allocation5 + $0x3c0] sm:$0xff]
    %v690 = vld [vmem:[#allocation5 + $0x3c8] sm:$0xff]
    %v691 = vld [vmem:[#allocation5 + $0x3d0] sm:$0xff]
    %v692 = vld [vmem:[#allocation5 + $0x3d8] sm:$0xff]
    %v693 = vld [vmem:[#allocation5 + $0x3e0] sm:$0xff]
    %v694 = vld [vmem:[#allocation5 + $0x3e8] sm:$0xff]
    %v695 = vld [vmem:[#allocation5 + $0x3f0] sm:$0xff]
    %v696 = vld [vmem:[#allocation5 + $0x3f8] sm:$0xff]
    %v697 = vld [vmem:[%s4] sm:$0xf]
    %v699 = vlaneseq
    %v700 = vshrl.u32 %v699, 7
    %v701 = vsub.s32 0, %v700
    %v702 = vrot.slane %v697, %v701
    %v703 = vlaneseq
    %v704 = vshrl.u32 %v703, 7
    %v705 = vsub.s32 1, %v704
    %v706 = vrot.slane %v697, %v705
    %v707 = vlaneseq
    %v708 = vshrl.u32 %v707, 7
    %v709 = vsub.s32 2, %v708
    %v710 = vrot.slane %v697, %v709
    %v711 = vlaneseq
    %v712 = vshrl.u32 %v711, 7
    %v713 = vsub.s32 3, %v712
    %v714 = vrot.slane %v697, %v713
    %v847 = vunpack.c.l.b16 %v569
    %v848 = vunpack.c.h.b16 %v569
    %v849 = vunpack.c.l.b16 %v570
    %v850 = vunpack.c.h.b16 %v570
    %v851 = vunpack.c.l.b16 %v571
    %v852 = vunpack.c.h.b16 %v571
    %v853 = vunpack.c.l.b16 %v572
    %v854 = vunpack.c.h.b16 %v572
    %v855 = vunpack.c.l.b16 %v573
    %v856 = vunpack.c.h.b16 %v573
    %v857 = vunpack.c.l.b16 %v574
    %v858 = vunpack.c.h.b16 %v574
    %v859 = vunpack.c.l.b16 %v575
    %v860 = vunpack.c.h.b16 %v575
    %v861 = vunpack.c.l.b16 %v576
    %v862 = vunpack.c.h.b16 %v576
    %v863 = vunpack.c.l.b16 %v577
    %v864 = vunpack.c.h.b16 %v577
    %v865 = vunpack.c.l.b16 %v578
    %v866 = vunpack.c.h.b16 %v578
    %v867 = vunpack.c.l.b16 %v579
    %v868 = vunpack.c.h.b16 %v579
    %v869 = vunpack.c.l.b16 %v580
    %v870 = vunpack.c.h.b16 %v580
    %v871 = vunpack.c.l.b16 %v581
    %v872 = vunpack.c.h.b16 %v581
    %v873 = vunpack.c.l.b16 %v582
    %v874 = vunpack.c.h.b16 %v582
    %v875 = vunpack.c.l.b16 %v583
    %v876 = vunpack.c.h.b16 %v583
    %v877 = vunpack.c.l.b16 %v584
    %v878 = vunpack.c.h.b16 %v584
    %v879 = vunpack.c.l.b16 %v585
    %v880 = vunpack.c.h.b16 %v585
    %v881 = vunpack.c.l.b16 %v586
    %v882 = vunpack.c.h.b16 %v586
    %v883 = vunpack.c.l.b16 %v587
    %v884 = vunpack.c.h.b16 %v587
    %v885 = vunpack.c.l.b16 %v588
    %v886 = vunpack.c.h.b16 %v588
    %v887 = vunpack.c.l.b16 %v589
    %v888 = vunpack.c.h.b16 %v589
    %v889 = vunpack.c.l.b16 %v590
    %v890 = vunpack.c.h.b16 %v590
    %v891 = vunpack.c.l.b16 %v591
    %v892 = vunpack.c.h.b16 %v591
    %v893 = vunpack.c.l.b16 %v592
    %v894 = vunpack.c.h.b16 %v592
    %v895 = vunpack.c.l.b16 %v593
    %v896 = vunpack.c.h.b16 %v593
    %v897 = vunpack.c.l.b16 %v594
    %v898 = vunpack.c.h.b16 %v594
    %v899 = vunpack.c.l.b16 %v595
    %v900 = vunpack.c.h.b16 %v595
    %v901 = vunpack.c.l.b16 %v596
    %v902 = vunpack.c.h.b16 %v596
    %v903 = vunpack.c.l.b16 %v597
    %v904 = vunpack.c.h.b16 %v597
    %v905 = vunpack.c.l.b16 %v598
    %v906 = vunpack.c.h.b16 %v598
    %v907 = vunpack.c.l.b16 %v599
    %v908 = vunpack.c.h.b16 %v599
    %v909 = vunpack.c.l.b16 %v600
    %v910 = vunpack.c.h.b16 %v600
    %v911 = vunpack.c.l.b16 %v601
    %v912 = vunpack.c.h.b16 %v601
    %v913 = vunpack.c.l.b16 %v602
    %v914 = vunpack.c.h.b16 %v602
    %v915 = vunpack.c.l.b16 %v603
    %v916 = vunpack.c.h.b16 %v603
    %v917 = vunpack.c.l.b16 %v604
    %v918 = vunpack.c.h.b16 %v604
    %v919 = vunpack.c.l.b16 %v605
    %v920 = vunpack.c.h.b16 %v605
    %v921 = vunpack.c.l.b16 %v606
    %v922 = vunpack.c.h.b16 %v606
    %v923 = vunpack.c.l.b16 %v607
    %v924 = vunpack.c.h.b16 %v607
    %v925 = vunpack.c.l.b16 %v608
    %v926 = vunpack.c.h.b16 %v608
    %v927 = vunpack.c.l.b16 %v609
    %v928 = vunpack.c.h.b16 %v609
    %v929 = vunpack.c.l.b16 %v610
    %v930 = vunpack.c.h.b16 %v610
    %v931 = vunpack.c.l.b16 %v611
    %v932 = vunpack.c.h.b16 %v611
    %v933 = vunpack.c.l.b16 %v612
    %v934 = vunpack.c.h.b16 %v612
    %v935 = vunpack.c.l.b16 %v613
    %v936 = vunpack.c.h.b16 %v613
    %v937 = vunpack.c.l.b16 %v614
    %v938 = vunpack.c.h.b16 %v614
    %v939 = vunpack.c.l.b16 %v615
    %v940 = vunpack.c.h.b16 %v615
    %v941 = vunpack.c.l.b16 %v616
    %v942 = vunpack.c.h.b16 %v616
    %v943 = vunpack.c.l.b16 %v617
    %v944 = vunpack.c.h.b16 %v617
    %v945 = vunpack.c.l.b16 %v618
    %v946 = vunpack.c.h.b16 %v618
    %v947 = vunpack.c.l.b16 %v619
    %v948 = vunpack.c.h.b16 %v619
    %v949 = vunpack.c.l.b16 %v620
    %v950 = vunpack.c.h.b16 %v620
    %v951 = vunpack.c.l.b16 %v621
    %v952 = vunpack.c.h.b16 %v621
    %v953 = vunpack.c.l.b16 %v622
    %v954 = vunpack.c.h.b16 %v622
    %v955 = vunpack.c.l.b16 %v623
    %v956 = vunpack.c.h.b16 %v623
    %v957 = vunpack.c.l.b16 %v624
    %v958 = vunpack.c.h.b16 %v624
    %v959 = vunpack.c.l.b16 %v625
    %v960 = vunpack.c.h.b16 %v625
    %v961 = vunpack.c.l.b16 %v626
    %v962 = vunpack.c.h.b16 %v626
    %v963 = vunpack.c.l.b16 %v627
    %v964 = vunpack.c.h.b16 %v627
    %v965 = vunpack.c.l.b16 %v628
    %v966 = vunpack.c.h.b16 %v628
    %v967 = vunpack.c.l.b16 %v629
    %v968 = vunpack.c.h.b16 %v629
    %v969 = vunpack.c.l.b16 %v630
    %v970 = vunpack.c.h.b16 %v630
    %v971 = vunpack.c.l.b16 %v631
    %v972 = vunpack.c.h.b16 %v631
    %v973 = vunpack.c.l.b16 %v632
    %v974 = vunpack.c.h.b16 %v632
    %v975 = vunpack.c.l.b16 %v633
    %v976 = vunpack.c.h.b16 %v633
    %v977 = vunpack.c.l.b16 %v634
    %v978 = vunpack.c.h.b16 %v634
    %v979 = vunpack.c.l.b16 %v635
    %v980 = vunpack.c.h.b16 %v635
    %v981 = vunpack.c.l.b16 %v636
    %v982 = vunpack.c.h.b16 %v636
    %v983 = vunpack.c.l.b16 %v637
    %v984 = vunpack.c.h.b16 %v637
    %v985 = vunpack.c.l.b16 %v638
    %v986 = vunpack.c.h.b16 %v638
    %v987 = vunpack.c.l.b16 %v639
    %v988 = vunpack.c.h.b16 %v639
    %v989 = vunpack.c.l.b16 %v640
    %v990 = vunpack.c.h.b16 %v640
    %v991 = vunpack.c.l.b16 %v641
    %v992 = vunpack.c.h.b16 %v641
    %v993 = vunpack.c.l.b16 %v642
    %v994 = vunpack.c.h.b16 %v642
    %v995 = vunpack.c.l.b16 %v643
    %v996 = vunpack.c.h.b16 %v643
    %v997 = vunpack.c.l.b16 %v644
    %v998 = vunpack.c.h.b16 %v644
    %v999 = vunpack.c.l.b16 %v645
    %v1000 = vunpack.c.h.b16 %v645
    %v1001 = vunpack.c.l.b16 %v646
    %v1002 = vunpack.c.h.b16 %v646
    %v1003 = vunpack.c.l.b16 %v647
    %v1004 = vunpack.c.h.b16 %v647
    %v1005 = vunpack.c.l.b16 %v648
    %v1006 = vunpack.c.h.b16 %v648
    %v1007 = vunpack.c.l.b16 %v649
    %v1008 = vunpack.c.h.b16 %v649
    %v1009 = vunpack.c.l.b16 %v650
    %v1010 = vunpack.c.h.b16 %v650
    %v1011 = vunpack.c.l.b16 %v651
    %v1012 = vunpack.c.h.b16 %v651
    %v1013 = vunpack.c.l.b16 %v652
    %v1014 = vunpack.c.h.b16 %v652
    %v1015 = vunpack.c.l.b16 %v653
    %v1016 = vunpack.c.h.b16 %v653
    %v1017 = vunpack.c.l.b16 %v654
    %v1018 = vunpack.c.h.b16 %v654
    %v1019 = vunpack.c.l.b16 %v655
    %v1020 = vunpack.c.h.b16 %v655
    %v1021 = vunpack.c.l.b16 %v656
    %v1022 = vunpack.c.h.b16 %v656
    %v1023 = vunpack.c.l.b16 %v657
    %v1024 = vunpack.c.h.b16 %v657
    %v1025 = vunpack.c.l.b16 %v658
    %v1026 = vunpack.c.h.b16 %v658
    %v1027 = vunpack.c.l.b16 %v659
    %v1028 = vunpack.c.h.b16 %v659
    %v1029 = vunpack.c.l.b16 %v660
    %v1030 = vunpack.c.h.b16 %v660
    %v1031 = vunpack.c.l.b16 %v661
    %v1032 = vunpack.c.h.b16 %v661
    %v1033 = vunpack.c.l.b16 %v662
    %v1034 = vunpack.c.h.b16 %v662
    %v1035 = vunpack.c.l.b16 %v663
    %v1036 = vunpack.c.h.b16 %v663
    %v1037 = vunpack.c.l.b16 %v664
    %v1038 = vunpack.c.h.b16 %v664
    %v1039 = vunpack.c.l.b16 %v665
    %v1040 = vunpack.c.h.b16 %v665
    %v1041 = vunpack.c.l.b16 %v666
    %v1042 = vunpack.c.h.b16 %v666
    %v1043 = vunpack.c.l.b16 %v667
    %v1044 = vunpack.c.h.b16 %v667
    %v1045 = vunpack.c.l.b16 %v668
    %v1046 = vunpack.c.h.b16 %v668
    %v1047 = vunpack.c.l.b16 %v669
    %v1048 = vunpack.c.h.b16 %v669
    %v1049 = vunpack.c.l.b16 %v670
    %v1050 = vunpack.c.h.b16 %v670
    %v1051 = vunpack.c.l.b16 %v671
    %v1052 = vunpack.c.h.b16 %v671
    %v1053 = vunpack.c.l.b16 %v672
    %v1054 = vunpack.c.h.b16 %v672
    %v1055 = vunpack.c.l.b16 %v673
    %v1056 = vunpack.c.h.b16 %v673
    %v1057 = vunpack.c.l.b16 %v674
    %v1058 = vunpack.c.h.b16 %v674
    %v1059 = vunpack.c.l.b16 %v675
    %v1060 = vunpack.c.h.b16 %v675
    %v1061 = vunpack.c.l.b16 %v676
    %v1062 = vunpack.c.h.b16 %v676
    %v1063 = vunpack.c.l.b16 %v677
    %v1064 = vunpack.c.h.b16 %v677
    %v1065 = vunpack.c.l.b16 %v678
    %v1066 = vunpack.c.h.b16 %v678
    %v1067 = vunpack.c.l.b16 %v679
    %v1068 = vunpack.c.h.b16 %v679
    %v1069 = vunpack.c.l.b16 %v680
    %v1070 = vunpack.c.h.b16 %v680
    %v1071 = vunpack.c.l.b16 %v681
    %v1072 = vunpack.c.h.b16 %v681
    %v1073 = vunpack.c.l.b16 %v682
    %v1074 = vunpack.c.h.b16 %v682
    %v1075 = vunpack.c.l.b16 %v683
    %v1076 = vunpack.c.h.b16 %v683
    %v1077 = vunpack.c.l.b16 %v684
    %v1078 = vunpack.c.h.b16 %v684
    %v1079 = vunpack.c.l.b16 %v685
    %v1080 = vunpack.c.h.b16 %v685
    %v1081 = vunpack.c.l.b16 %v686
    %v1082 = vunpack.c.h.b16 %v686
    %v1083 = vunpack.c.l.b16 %v687
    %v1084 = vunpack.c.h.b16 %v687
    %v1085 = vunpack.c.l.b16 %v688
    %v1086 = vunpack.c.h.b16 %v688
    %v1087 = vunpack.c.l.b16 %v689
    %v1088 = vunpack.c.h.b16 %v689
    %v1089 = vunpack.c.l.b16 %v690
    %v1090 = vunpack.c.h.b16 %v690
    %v1091 = vunpack.c.l.b16 %v691
    %v1092 = vunpack.c.h.b16 %v691
    %v1093 = vunpack.c.l.b16 %v692
    %v1094 = vunpack.c.h.b16 %v692
    %v1095 = vunpack.c.l.b16 %v693
    %v1096 = vunpack.c.h.b16 %v693
    %v1097 = vunpack.c.l.b16 %v694
    %v1098 = vunpack.c.h.b16 %v694
    %v1099 = vunpack.c.l.b16 %v695
    %v1100 = vunpack.c.h.b16 %v695
    %v1101 = vunpack.c.l.b16 %v696
    %v1102 = vunpack.c.h.b16 %v696
    %v1103 = vpack.c.b16 %v851, %v847
    %v1104 = vpack.c.b16 %v852, %v848
    %v1105 = vpack.c.b16 %v853, %v849
    %v1106 = vpack.c.b16 %v854, %v850
    %v1107 = vpack.c.b16 %v859, %v855
    %v1108 = vpack.c.b16 %v860, %v856
    %v1109 = vpack.c.b16 %v861, %v857
    %v1110 = vpack.c.b16 %v862, %v858
    %v1111 = vpack.c.b16 %v867, %v863
    %v1112 = vpack.c.b16 %v868, %v864
    %v1113 = vpack.c.b16 %v869, %v865
    %v1114 = vpack.c.b16 %v870, %v866
    %v1115 = vpack.c.b16 %v875, %v871
    %v1116 = vpack.c.b16 %v876, %v872
    %v1117 = vpack.c.b16 %v877, %v873
    %v1118 = vpack.c.b16 %v878, %v874
    %v1119 = vpack.c.b16 %v883, %v879
    %v1120 = vpack.c.b16 %v884, %v880
    %v1121 = vpack.c.b16 %v885, %v881
    %v1122 = vpack.c.b16 %v886, %v882
    %v1123 = vpack.c.b16 %v891, %v887
    %v1124 = vpack.c.b16 %v892, %v888
    %v1125 = vpack.c.b16 %v893, %v889
    %v1126 = vpack.c.b16 %v894, %v890
    %v1127 = vpack.c.b16 %v899, %v895
    %v1128 = vpack.c.b16 %v900, %v896
    %v1129 = vpack.c.b16 %v901, %v897
    %v1130 = vpack.c.b16 %v902, %v898
    %v1131 = vpack.c.b16 %v907, %v903
    %v1132 = vpack.c.b16 %v908, %v904
    %v1133 = vpack.c.b16 %v909, %v905
    %v1134 = vpack.c.b16 %v910, %v906
    %v1135 = vpack.c.b16 %v915, %v911
    %v1136 = vpack.c.b16 %v916, %v912
    %v1137 = vpack.c.b16 %v917, %v913
    %v1138 = vpack.c.b16 %v918, %v914
    %v1139 = vpack.c.b16 %v923, %v919
    %v1140 = vpack.c.b16 %v924, %v920
    %v1141 = vpack.c.b16 %v925, %v921
    %v1142 = vpack.c.b16 %v926, %v922
    %v1143 = vpack.c.b16 %v931, %v927
    %v1144 = vpack.c.b16 %v932, %v928
    %v1145 = vpack.c.b16 %v933, %v929
    %v1146 = vpack.c.b16 %v934, %v930
    %v1147 = vpack.c.b16 %v939, %v935
    %v1148 = vpack.c.b16 %v940, %v936
    %v1149 = vpack.c.b16 %v941, %v937
    %v1150 = vpack.c.b16 %v942, %v938
    %v1151 = vpack.c.b16 %v947, %v943
    %v1152 = vpack.c.b16 %v948, %v944
    %v1153 = vpack.c.b16 %v949, %v945
    %v1154 = vpack.c.b16 %v950, %v946
    %v1155 = vpack.c.b16 %v955, %v951
    %v1156 = vpack.c.b16 %v956, %v952
    %v1157 = vpack.c.b16 %v957, %v953
    %v1158 = vpack.c.b16 %v958, %v954
    %v1159 = vpack.c.b16 %v963, %v959
    %v1160 = vpack.c.b16 %v964, %v960
    %v1161 = vpack.c.b16 %v965, %v961
    %v1162 = vpack.c.b16 %v966, %v962
    %v1163 = vpack.c.b16 %v971, %v967
    %v1164 = vpack.c.b16 %v972, %v968
    %v1165 = vpack.c.b16 %v973, %v969
    %v1166 = vpack.c.b16 %v974, %v970
    %v1167 = vpack.c.b16 %v979, %v975
    %v1168 = vpack.c.b16 %v980, %v976
    %v1169 = vpack.c.b16 %v981, %v977
    %v1170 = vpack.c.b16 %v982, %v978
    %v1171 = vpack.c.b16 %v987, %v983
    %v1172 = vpack.c.b16 %v988, %v984
    %v1173 = vpack.c.b16 %v989, %v985
    %v1174 = vpack.c.b16 %v990, %v986
    %v1175 = vpack.c.b16 %v995, %v991
    %v1176 = vpack.c.b16 %v996, %v992
    %v1177 = vpack.c.b16 %v997, %v993
    %v1178 = vpack.c.b16 %v998, %v994
    %v1179 = vpack.c.b16 %v1003, %v999
    %v1180 = vpack.c.b16 %v1004, %v1000
    %v1181 = vpack.c.b16 %v1005, %v1001
    %v1182 = vpack.c.b16 %v1006, %v1002
    %v1183 = vpack.c.b16 %v1011, %v1007
    %v1184 = vpack.c.b16 %v1012, %v1008
    %v1185 = vpack.c.b16 %v1013, %v1009
    %v1186 = vpack.c.b16 %v1014, %v1010
    %v1187 = vpack.c.b16 %v1019, %v1015
    %v1188 = vpack.c.b16 %v1020, %v1016
    %v1189 = vpack.c.b16 %v1021, %v1017
    %v1190 = vpack.c.b16 %v1022, %v1018
    %v1191 = vpack.c.b16 %v1027, %v1023
    %v1192 = vpack.c.b16 %v1028, %v1024
    %v1193 = vpack.c.b16 %v1029, %v1025
    %v1194 = vpack.c.b16 %v1030, %v1026
    %v1195 = vpack.c.b16 %v1035, %v1031
    %v1196 = vpack.c.b16 %v1036, %v1032
    %v1197 = vpack.c.b16 %v1037, %v1033
    %v1198 = vpack.c.b16 %v1038, %v1034
    %v1199 = vpack.c.b16 %v1043, %v1039
    %v1200 = vpack.c.b16 %v1044, %v1040
    %v1201 = vpack.c.b16 %v1045, %v1041
    %v1202 = vpack.c.b16 %v1046, %v1042
    %v1203 = vpack.c.b16 %v1051, %v1047
    %v1204 = vpack.c.b16 %v1052, %v1048
    %v1205 = vpack.c.b16 %v1053, %v1049
    %v1206 = vpack.c.b16 %v1054, %v1050
    %v1207 = vpack.c.b16 %v1059, %v1055
    %v1208 = vpack.c.b16 %v1060, %v1056
    %v1209 = vpack.c.b16 %v1061, %v1057
    %v1210 = vpack.c.b16 %v1062, %v1058
    %v1211 = vpack.c.b16 %v1067, %v1063
    %v1212 = vpack.c.b16 %v1068, %v1064
    %v1213 = vpack.c.b16 %v1069, %v1065
    %v1214 = vpack.c.b16 %v1070, %v1066
    %v1215 = vpack.c.b16 %v1075, %v1071
    %v1216 = vpack.c.b16 %v1076, %v1072
    %v1217 = vpack.c.b16 %v1077, %v1073
    %v1218 = vpack.c.b16 %v1078, %v1074
    %v1219 = vpack.c.b16 %v1083, %v1079
    %v1220 = vpack.c.b16 %v1084, %v1080
    %v1221 = vpack.c.b16 %v1085, %v1081
    %v1222 = vpack.c.b16 %v1086, %v1082
    %v1223 = vpack.c.b16 %v1091, %v1087
    %v1224 = vpack.c.b16 %v1092, %v1088
    %v1225 = vpack.c.b16 %v1093, %v1089
    %v1226 = vpack.c.b16 %v1094, %v1090
    %v1227 = vpack.c.b16 %v1099, %v1095
    %v1228 = vpack.c.b16 %v1100, %v1096
    %v1229 = vpack.c.b16 %v1101, %v1097
    %v1230 = vpack.c.b16 %v1102, %v1098
    %1359 = vmatprep.subr.bf16.mxu0 %v1132
    %1360 = vmatpush1.bf16.msra.mxu0 %v1131
    %1361 = vmatprep.subr.bf16.mxu0 %v1128
    %1362 = vmatpush1.bf16.msra.mxu0 %v1127
    %1363 = vmatprep.subr.bf16.mxu0 %v1124
    %1364 = vmatpush1.bf16.msra.mxu0 %v1123
    %1365 = vmatprep.subr.bf16.mxu0 %v1120
    %1366 = vmatpush1.bf16.msra.mxu0 %v1119
    %1367 = vmatprep.subr.bf16.mxu0 %v1116
    %1368 = vmatpush1.bf16.msra.mxu0 %v1115
    %1369 = vmatprep.subr.bf16.mxu0 %v1112
    %1370 = vmatpush1.bf16.msra.mxu0 %v1111
    %1371 = vmatprep.subr.bf16.mxu0 %v1108
    %1372 = vmatpush1.bf16.msra.mxu0 %v1107
    %1373 = vmatprep.subr.bf16.mxu0 %v1104
    %1374 = vmatpush1.bf16.msra.mxu0 %v1103
    %1375 = vmatprep.subr.bf16.mxu0 %v1164
    %1376 = vmatpush2.bf16.msra.mxu0 %v1163
    %1377 = vmatprep.subr.bf16.mxu0 %v1160
    %1378 = vmatpush2.bf16.msra.mxu0 %v1159
    %1379 = vmatprep.subr.bf16.mxu0 %v1156
    %1380 = vmatpush2.bf16.msra.mxu0 %v1155
    %1381 = vmatprep.subr.bf16.mxu0 %v1152
    %1382 = vmatpush2.bf16.msra.mxu0 %v1151
    %1383 = vmatprep.subr.bf16.mxu0 %v1148
    %1384 = vmatpush2.bf16.msra.mxu0 %v1147
    %1385 = vmatprep.subr.bf16.mxu0 %v1144
    %1386 = vmatpush2.bf16.msra.mxu0 %v1143
    %1387 = vmatprep.subr.bf16.mxu0 %v1140
    %1388 = vmatpush2.bf16.msra.mxu0 %v1139
    %1389 = vmatprep.subr.bf16.mxu0 %v1136
    %1390 = vmatpush2.bf16.msra.mxu0 %v1135
    %1391 = vmatprep.mubr.bf16.mxu0 %v566
    %1392 = vmatmul.mubr.bf16.gmra.mxu0 %v565
    %v1393 = vpop.f32.mrf.mxu0
    %v1394 = vadd.f32 %v702, %v1393
    %v1395 = vpop.f32.mrf.mxu0
    %v1396 = vadd.f32 %v706, %v1395
    %v1397 = vpop.f32.mrf.mxu0
    %v1398 = vpop.f32.mrf.mxu0
    %1399 = vdwg.mxu0
    %1400 = vmatprep.subr.bf16.mxu0 %v1196
    %1401 = vmatpush1.bf16.msra.mxu0 %v1195
    %1402 = vmatprep.subr.bf16.mxu0 %v1192
    %1403 = vmatpush1.bf16.msra.mxu0 %v1191
    %1404 = vmatprep.subr.bf16.mxu0 %v1188
    %1405 = vmatpush1.bf16.msra.mxu0 %v1187
    %1406 = vmatprep.subr.bf16.mxu0 %v1184
    %1407 = vmatpush1.bf16.msra.mxu0 %v1183
    %1408 = vmatprep.subr.bf16.mxu0 %v1180
    %1409 = vmatpush1.bf16.msra.mxu0 %v1179
    %1410 = vmatprep.subr.bf16.mxu0 %v1176
    %1411 = vmatpush1.bf16.msra.mxu0 %v1175
    %1412 = vmatprep.subr.bf16.mxu0 %v1172
    %1413 = vmatpush1.bf16.msra.mxu0 %v1171
    %1414 = vmatprep.subr.bf16.mxu0 %v1168
    %1415 = vmatpush1.bf16.msra.mxu0 %v1167
    %1416 = vmatprep.subr.bf16.mxu0 %v1228
    %1417 = vmatpush2.bf16.msra.mxu0 %v1227
    %1418 = vmatprep.subr.bf16.mxu0 %v1224
    %1419 = vmatpush2.bf16.msra.mxu0 %v1223
    %1420 = vmatprep.subr.bf16.mxu0 %v1220
    %1421 = vmatpush2.bf16.msra.mxu0 %v1219
    %1422 = vmatprep.subr.bf16.mxu0 %v1216
    %1423 = vmatpush2.bf16.msra.mxu0 %v1215
    %1424 = vmatprep.subr.bf16.mxu0 %v1212
    %1425 = vmatpush2.bf16.msra.mxu0 %v1211
    %1426 = vmatprep.subr.bf16.mxu0 %v1208
    %1427 = vmatpush2.bf16.msra.mxu0 %v1207
    %1428 = vmatprep.subr.bf16.mxu0 %v1204
    %1429 = vmatpush2.bf16.msra.mxu0 %v1203
    %1430 = vmatprep.subr.bf16.mxu0 %v1200
    %1431 = vmatpush2.bf16.msra.mxu0 %v1199
    %1432 = vmatprep.mubr.bf16.mxu0 %v568
    %1433 = vmatmul.mubr.bf16.gmra.mxu0 %v567
    %v1434 = vpop.f32.mrf.mxu0
    %v1435 = vadd.f32 %v1394, %v1434
    %v1436 = vpop.f32.mrf.mxu0
    %v1437 = vadd.f32 %v1396, %v1436
    %v1438 = vpop.f32.mrf.mxu0
    %v1439 = vpop.f32.mrf.mxu0
    %1440 = vdwg.mxu0
    %1441 = vmatprep.subr.bf16.mxu0 %v1134
    %1442 = vmatpush1.bf16.msra.mxu0 %v1133
    %1443 = vmatprep.subr.bf16.mxu0 %v1130
    %1444 = vmatpush1.bf16.msra.mxu0 %v1129
    %1445 = vmatprep.subr.bf16.mxu0 %v1126
    %1446 = vmatpush1.bf16.msra.mxu0 %v1125
    %1447 = vmatprep.subr.bf16.mxu0 %v1122
    %1448 = vmatpush1.bf16.msra.mxu0 %v1121
    %1449 = vmatprep.subr.bf16.mxu0 %v1118
    %1450 = vmatpush1.bf16.msra.mxu0 %v1117
    %1451 = vmatprep.subr.bf16.mxu0 %v1114
    %1452 = vmatpush1.bf16.msra.mxu0 %v1113
    %1453 = vmatprep.subr.bf16.mxu0 %v1110
    %1454 = vmatpush1.bf16.msra.mxu0 %v1109
    %1455 = vmatprep.subr.bf16.mxu0 %v1106
    %1456 = vmatpush1.bf16.msra.mxu0 %v1105
    %1457 = vmatprep.subr.bf16.mxu0 %v1166
    %1458 = vmatpush2.bf16.msra.mxu0 %v1165
    %1459 = vmatprep.subr.bf16.mxu0 %v1162
    %1460 = vmatpush2.bf16.msra.mxu0 %v1161
    %1461 = vmatprep.subr.bf16.mxu0 %v1158
    %1462 = vmatpush2.bf16.msra.mxu0 %v1157
    %1463 = vmatprep.subr.bf16.mxu0 %v1154
    %1464 = vmatpush2.bf16.msra.mxu0 %v1153
    %1465 = vmatprep.subr.bf16.mxu0 %v1150
    %1466 = vmatpush2.bf16.msra.mxu0 %v1149
    %1467 = vmatprep.subr.bf16.mxu0 %v1146
    %1468 = vmatpush2.bf16.msra.mxu0 %v1145
    %1469 = vmatprep.subr.bf16.mxu0 %v1142
    %1470 = vmatpush2.bf16.msra.mxu0 %v1141
    %1471 = vmatprep.subr.bf16.mxu0 %v1138
    %1472 = vmatpush2.bf16.msra.mxu0 %v1137
    %1473 = vmatprep.mubr.bf16.mxu0 %v566
    %1474 = vmatmul.mubr.bf16.gmra.mxu0 %v565
    %v1475 = vpop.f32.mrf.mxu0
    %v1476 = vadd.f32 %v710, %v1475
    %v1477 = vpop.f32.mrf.mxu0
    %v1478 = vadd.f32 %v714, %v1477
    %v1479 = vpop.f32.mrf.mxu0
    %v1480 = vpop.f32.mrf.mxu0
    %1481 = vdwg.mxu0
    %1482 = vmatprep.subr.bf16.mxu0 %v1198
    %1483 = vmatpush1.bf16.msra.mxu0 %v1197
    %1484 = vmatprep.subr.bf16.mxu0 %v1194
    %1485 = vmatpush1.bf16.msra.mxu0 %v1193
    %1486 = vmatprep.subr.bf16.mxu0 %v1190
    %1487 = vmatpush1.bf16.msra.mxu0 %v1189
    %1488 = vmatprep.subr.bf16.mxu0 %v1186
    %1489 = vmatpush1.bf16.msra.mxu0 %v1185
    %1490 = vmatprep.subr.bf16.mxu0 %v1182
    %1491 = vmatpush1.bf16.msra.mxu0 %v1181
    %1492 = vmatprep.subr.bf16.mxu0 %v1178
    %1493 = vmatpush1.bf16.msra.mxu0 %v1177
    %1494 = vmatprep.subr.bf16.mxu0 %v1174
    %1495 = vmatpush1.bf16.msra.mxu0 %v1173
    %1496 = vmatprep.subr.bf16.mxu0 %v1170
    %1497 = vmatpush1.bf16.msra.mxu0 %v1169
    %1498 = vmatprep.subr.bf16.mxu0 %v1230
    %1499 = vmatpush2.bf16.msra.mxu0 %v1229
    %1500 = vmatprep.subr.bf16.mxu0 %v1226
    %1501 = vmatpush2.bf16.msra.mxu0 %v1225
    %1502 = vmatprep.subr.bf16.mxu0 %v1222
    %1503 = vmatpush2.bf16.msra.mxu0 %v1221
    %1504 = vmatprep.subr.bf16.mxu0 %v1218
    %1505 = vmatpush2.bf16.msra.mxu0 %v1217
    %1506 = vmatprep.subr.bf16.mxu0 %v1214
    %1507 = vmatpush2.bf16.msra.mxu0 %v1213
    %1508 = vmatprep.subr.bf16.mxu0 %v1210
    %1509 = vmatpush2.bf16.msra.mxu0 %v1209
    %1510 = vmatprep.subr.bf16.mxu0 %v1206
    %1511 = vmatpush2.bf16.msra.mxu0 %v1205
    %1512 = vmatprep.subr.bf16.mxu0 %v1202
    %1513 = vmatpush2.bf16.msra.mxu0 %v1201
    %1514 = vmatprep.mubr.bf16.mxu0 %v568
    %1515 = vmatmul.mubr.bf16.gmra.mxu0 %v567
    %v1516 = vpop.f32.mrf.mxu0
    %v1517 = vadd.f32 %v1476, %v1516
    %v1518 = vpop.f32.mrf.mxu0
    %v1519 = vadd.f32 %v1478, %v1518
    %v1520 = vpop.f32.mrf.mxu0
    %v1521 = vpop.f32.mrf.mxu0
    %1522 = vdwg.mxu0
    %v1523 = vmax.f32 %v1435, 0.0
    %v1524 = vmax.f32 %v1437, 0.0
    %v1525 = vmax.f32 %v1517, 0.0
    %v1526 = vmax.f32 %v1519, 0.0
    %v1527 = vpack.c.bf16 %v1523, %v1523
    %v1528 = vpack.c.bf16 %v1524, %v1524
    %v1529 = vpack.c.bf16 %v1525, %v1525
    %v1530 = vpack.c.bf16 %v1526, %v1526
    %v1531 = vld [vmem:[#allocation7] sm:$0xf]
    %v1532 = vld [vmem:[#allocation7 + $0x4] sm:$0xf]
    %v1533 = vld [vmem:[#allocation7 + $0x8] sm:$0xf]
    %v1534 = vld [vmem:[#allocation7 + $0xc] sm:$0xf]
    %v1535 = vld [vmem:[#allocation7 + $0x10] sm:$0xf]
    %v1536 = vld [vmem:[#allocation7 + $0x14] sm:$0xf]
    %v1537 = vld [vmem:[#allocation7 + $0x18] sm:$0xf]
    %v1538 = vld [vmem:[#allocation7 + $0x1c] sm:$0xf]
    %v1539 = vld [vmem:[#allocation7 + $0x20] sm:$0xf]
    %v1540 = vld [vmem:[#allocation7 + $0x24] sm:$0xf]
    %v1541 = vld [vmem:[#allocation7 + $0x28] sm:$0xf]
    %v1542 = vld [vmem:[#allocation7 + $0x2c] sm:$0xf]
    %v1543 = vld [vmem:[#allocation7 + $0x30] sm:$0xf]
    %v1544 = vld [vmem:[#allocation7 + $0x34] sm:$0xf]
    %v1545 = vld [vmem:[#allocation7 + $0x38] sm:$0xf]
    %v1546 = vld [vmem:[#allocation7 + $0x3c] sm:$0xf]
    %v1547 = vld [vmem:[#allocation7 + $0x40] sm:$0xf]
    %v1548 = vld [vmem:[#allocation7 + $0x44] sm:$0xf]
    %v1549 = vld [vmem:[#allocation7 + $0x48] sm:$0xf]
    %v1550 = vld [vmem:[#allocation7 + $0x4c] sm:$0xf]
    %v1551 = vld [vmem:[#allocation7 + $0x50] sm:$0xf]
    %v1552 = vld [vmem:[#allocation7 + $0x54] sm:$0xf]
    %v1553 = vld [vmem:[#allocation7 + $0x58] sm:$0xf]
    %v1554 = vld [vmem:[#allocation7 + $0x5c] sm:$0xf]
    %v1555 = vld [vmem:[#allocation7 + $0x60] sm:$0xf]
    %v1556 = vld [vmem:[#allocation7 + $0x64] sm:$0xf]
    %v1557 = vld [vmem:[#allocation7 + $0x68] sm:$0xf]
    %v1558 = vld [vmem:[#allocation7 + $0x6c] sm:$0xf]
    %v1559 = vld [vmem:[#allocation7 + $0x70] sm:$0xf]
    %v1560 = vld [vmem:[#allocation7 + $0x74] sm:$0xf]
    %v1561 = vld [vmem:[#allocation7 + $0x78] sm:$0xf]
    %v1562 = vld [vmem:[#allocation7 + $0x7c] sm:$0xf]
    %v1563 = vld [vmem:[#allocation7 + $0x80] sm:$0xf]
    %v1564 = vld [vmem:[#allocation7 + $0x84] sm:$0xf]
    %v1565 = vld [vmem:[#allocation7 + $0x88] sm:$0xf]
    %v1566 = vld [vmem:[#allocation7 + $0x8c] sm:$0xf]
    %v1567 = vld [vmem:[#allocation7 + $0x90] sm:$0xf]
    %v1568 = vld [vmem:[#allocation7 + $0x94] sm:$0xf]
    %v1569 = vld [vmem:[#allocation7 + $0x98] sm:$0xf]
    %v1570 = vld [vmem:[#allocation7 + $0x9c] sm:$0xf]
    %v1571 = vld [vmem:[#allocation7 + $0xa0] sm:$0xf]
    %v1572 = vld [vmem:[#allocation7 + $0xa4] sm:$0xf]
    %v1573 = vld [vmem:[#allocation7 + $0xa8] sm:$0xf]
    %v1574 = vld [vmem:[#allocation7 + $0xac] sm:$0xf]
    %v1575 = vld [vmem:[#allocation7 + $0xb0] sm:$0xf]
    %v1576 = vld [vmem:[#allocation7 + $0xb4] sm:$0xf]
    %v1577 = vld [vmem:[#allocation7 + $0xb8] sm:$0xf]
    %v1578 = vld [vmem:[#allocation7 + $0xbc] sm:$0xf]
    %v1579 = vld [vmem:[#allocation7 + $0xc0] sm:$0xf]
    %v1580 = vld [vmem:[#allocation7 + $0xc4] sm:$0xf]
    %v1581 = vld [vmem:[#allocation7 + $0xc8] sm:$0xf]
    %v1582 = vld [vmem:[#allocation7 + $0xcc] sm:$0xf]
    %v1583 = vld [vmem:[#allocation7 + $0xd0] sm:$0xf]
    %v1584 = vld [vmem:[#allocation7 + $0xd4] sm:$0xf]
    %v1585 = vld [vmem:[#allocation7 + $0xd8] sm:$0xf]
    %v1586 = vld [vmem:[#allocation7 + $0xdc] sm:$0xf]
    %v1587 = vld [vmem:[#allocation7 + $0xe0] sm:$0xf]
    %v1588 = vld [vmem:[#allocation7 + $0xe4] sm:$0xf]
    %v1589 = vld [vmem:[#allocation7 + $0xe8] sm:$0xf]
    %v1590 = vld [vmem:[#allocation7 + $0xec] sm:$0xf]
    %v1591 = vld [vmem:[#allocation7 + $0xf0] sm:$0xf]
    %v1592 = vld [vmem:[#allocation7 + $0xf4] sm:$0xf]
    %v1593 = vld [vmem:[#allocation7 + $0xf8] sm:$0xf]
    %v1594 = vld [vmem:[#allocation7 + $0xfc] sm:$0xf]
    %v1595 = vld [vmem:[%s6] sm:$0x1]
    %v1597 = vlaneseq
    %v1598 = vshrl.u32 %v1597, 7
    %v1599 = vsub.s32 0, %v1598
    %v1600 = vrot.slane %v1595, %v1599
    %v1666 = vunpack.c.l.b16 %v1531
    %v1667 = vunpack.c.l.b16 %v1532
    %v1668 = vunpack.c.l.b16 %v1533
    %v1669 = vunpack.c.l.b16 %v1534
    %v1670 = vunpack.c.l.b16 %v1535
    %v1671 = vunpack.c.l.b16 %v1536
    %v1672 = vunpack.c.l.b16 %v1537
    %v1673 = vunpack.c.l.b16 %v1538
    %v1674 = vunpack.c.l.b16 %v1539
    %v1675 = vunpack.c.l.b16 %v1540
    %v1676 = vunpack.c.l.b16 %v1541
    %v1677 = vunpack.c.l.b16 %v1542
    %v1678 = vunpack.c.l.b16 %v1543
    %v1679 = vunpack.c.l.b16 %v1544
    %v1680 = vunpack.c.l.b16 %v1545
    %v1681 = vunpack.c.l.b16 %v1546
    %v1682 = vunpack.c.l.b16 %v1547
    %v1683 = vunpack.c.l.b16 %v1548
    %v1684 = vunpack.c.l.b16 %v1549
    %v1685 = vunpack.c.l.b16 %v1550
    %v1686 = vunpack.c.l.b16 %v1551
    %v1687 = vunpack.c.l.b16 %v1552
    %v1688 = vunpack.c.l.b16 %v1553
    %v1689 = vunpack.c.l.b16 %v1554
    %v1690 = vunpack.c.l.b16 %v1555
    %v1691 = vunpack.c.l.b16 %v1556
    %v1692 = vunpack.c.l.b16 %v1557
    %v1693 = vunpack.c.l.b16 %v1558
    %v1694 = vunpack.c.l.b16 %v1559
    %v1695 = vunpack.c.l.b16 %v1560
    %v1696 = vunpack.c.l.b16 %v1561
    %v1697 = vunpack.c.l.b16 %v1562
    %v1698 = vunpack.c.l.b16 %v1563
    %v1699 = vunpack.c.l.b16 %v1564
    %v1700 = vunpack.c.l.b16 %v1565
    %v1701 = vunpack.c.l.b16 %v1566
    %v1702 = vunpack.c.l.b16 %v1567
    %v1703 = vunpack.c.l.b16 %v1568
    %v1704 = vunpack.c.l.b16 %v1569
    %v1705 = vunpack.c.l.b16 %v1570
    %v1706 = vunpack.c.l.b16 %v1571
    %v1707 = vunpack.c.l.b16 %v1572
    %v1708 = vunpack.c.l.b16 %v1573
    %v1709 = vunpack.c.l.b16 %v1574
    %v1710 = vunpack.c.l.b16 %v1575
    %v1711 = vunpack.c.l.b16 %v1576
    %v1712 = vunpack.c.l.b16 %v1577
    %v1713 = vunpack.c.l.b16 %v1578
    %v1714 = vunpack.c.l.b16 %v1579
    %v1715 = vunpack.c.l.b16 %v1580
    %v1716 = vunpack.c.l.b16 %v1581
    %v1717 = vunpack.c.l.b16 %v1582
    %v1718 = vunpack.c.l.b16 %v1583
    %v1719 = vunpack.c.l.b16 %v1584
    %v1720 = vunpack.c.l.b16 %v1585
    %v1721 = vunpack.c.l.b16 %v1586
    %v1722 = vunpack.c.l.b16 %v1587
    %v1723 = vunpack.c.l.b16 %v1588
    %v1724 = vunpack.c.l.b16 %v1589
    %v1725 = vunpack.c.l.b16 %v1590
    %v1726 = vunpack.c.l.b16 %v1591
    %v1727 = vunpack.c.l.b16 %v1592
    %v1728 = vunpack.c.l.b16 %v1593
    %v1729 = vunpack.c.l.b16 %v1594
    %v1730 = vpack.c.b16 %v1667, %v1666
    %v1731 = vpack.c.b16 %v1669, %v1668
    %v1732 = vpack.c.b16 %v1671, %v1670
    %v1733 = vpack.c.b16 %v1673, %v1672
    %v1734 = vpack.c.b16 %v1675, %v1674
    %v1735 = vpack.c.b16 %v1677, %v1676
    %v1736 = vpack.c.b16 %v1679, %v1678
    %v1737 = vpack.c.b16 %v1681, %v1680
    %v1738 = vpack.c.b16 %v1683, %v1682
    %v1739 = vpack.c.b16 %v1685, %v1684
    %v1740 = vpack.c.b16 %v1687, %v1686
    %v1741 = vpack.c.b16 %v1689, %v1688
    %v1742 = vpack.c.b16 %v1691, %v1690
    %v1743 = vpack.c.b16 %v1693, %v1692
    %v1744 = vpack.c.b16 %v1695, %v1694
    %v1745 = vpack.c.b16 %v1697, %v1696
    %v1746 = vpack.c.b16 %v1699, %v1698
    %v1747 = vpack.c.b16 %v1701, %v1700
    %v1748 = vpack.c.b16 %v1703, %v1702
    %v1749 = vpack.c.b16 %v1705, %v1704
    %v1750 = vpack.c.b16 %v1707, %v1706
    %v1751 = vpack.c.b16 %v1709, %v1708
    %v1752 = vpack.c.b16 %v1711, %v1710
    %v1753 = vpack.c.b16 %v1713, %v1712
    %v1754 = vpack.c.b16 %v1715, %v1714
    %v1755 = vpack.c.b16 %v1717, %v1716
    %v1756 = vpack.c.b16 %v1719, %v1718
    %v1757 = vpack.c.b16 %v1721, %v1720
    %v1758 = vpack.c.b16 %v1723, %v1722
    %v1759 = vpack.c.b16 %v1725, %v1724
    %v1760 = vpack.c.b16 %v1727, %v1726
    %v1761 = vpack.c.b16 %v1729, %v1728
    %1794 = vmatprep.subr.bf16.mxu0 0
    %1795 = vmatpush1.bf16.msra.mxu0 %v1737
    %1796 = vmatprep.subr.bf16.mxu0 0
    %1797 = vmatpush1.bf16.msra.mxu0 %v1736
    %1798 = vmatprep.subr.bf16.mxu0 0
    %1799 = vmatpush1.bf16.msra.mxu0 %v1735
    %1800 = vmatprep.subr.bf16.mxu0 0
    %1801 = vmatpush1.bf16.msra.mxu0 %v1734
    %1802 = vmatprep.subr.bf16.mxu0 0
    %1803 = vmatpush1.bf16.msra.mxu0 %v1733
    %1804 = vmatprep.subr.bf16.mxu0 0
    %1805 = vmatpush1.bf16.msra.mxu0 %v1732
    %1806 = vmatprep.subr.bf16.mxu0 0
    %1807 = vmatpush1.bf16.msra.mxu0 %v1731
    %1808 = vmatprep.subr.bf16.mxu0 0
    %1809 = vmatpush1.bf16.msra.mxu0 %v1730
    %1810 = vmatprep.subr.bf16.mxu0 0
    %1811 = vmatpush2.bf16.msra.mxu0 %v1745
    %1812 = vmatprep.subr.bf16.mxu0 0
    %1813 = vmatpush2.bf16.msra.mxu0 %v1744
    %1814 = vmatprep.subr.bf16.mxu0 0
    %1815 = vmatpush2.bf16.msra.mxu0 %v1743
    %1816 = vmatprep.subr.bf16.mxu0 0
    %1817 = vmatpush2.bf16.msra.mxu0 %v1742
    %1818 = vmatprep.subr.bf16.mxu0 0
    %1819 = vmatpush2.bf16.msra.mxu0 %v1741
    %1820 = vmatprep.subr.bf16.mxu0 0
    %1821 = vmatpush2.bf16.msra.mxu0 %v1740
    %1822 = vmatprep.subr.bf16.mxu0 0
    %1823 = vmatpush2.bf16.msra.mxu0 %v1739
    %1824 = vmatprep.subr.bf16.mxu0 0
    %1825 = vmatpush2.bf16.msra.mxu0 %v1738
    %1826 = vmatprep.mubr.bf16.mxu0 %v1528
    %1827 = vmatmul.mubr.bf16.gmra.mxu0 %v1527
    %v1828 = vpop.f32.mrf.mxu0
    %v1829 = vadd.f32 %v1600, %v1828
    %v1830 = vpop.f32.mrf.mxu0
    %v1831 = vpop.f32.mrf.mxu0
    %v1832 = vpop.f32.mrf.mxu0
    %1833 = vdwg.mxu0
    %1834 = vmatprep.subr.bf16.mxu0 0
    %1835 = vmatpush1.bf16.msra.mxu0 %v1753
    %1836 = vmatprep.subr.bf16.mxu0 0
    %1837 = vmatpush1.bf16.msra.mxu0 %v1752
    %1838 = vmatprep.subr.bf16.mxu0 0
    %1839 = vmatpush1.bf16.msra.mxu0 %v1751
    %1840 = vmatprep.subr.bf16.mxu0 0
    %1841 = vmatpush1.bf16.msra.mxu0 %v1750
    %1842 = vmatprep.subr.bf16.mxu0 0
    %1843 = vmatpush1.bf16.msra.mxu0 %v1749
    %1844 = vmatprep.subr.bf16.mxu0 0
    %1845 = vmatpush1.bf16.msra.mxu0 %v1748
    %1846 = vmatprep.subr.bf16.mxu0 0
    %1847 = vmatpush1.bf16.msra.mxu0 %v1747
    %1848 = vmatprep.subr.bf16.mxu0 0
    %1849 = vmatpush1.bf16.msra.mxu0 %v1746
    %1850 = vmatprep.subr.bf16.mxu0 0
    %1851 = vmatpush2.bf16.msra.mxu0 %v1761
    %1852 = vmatprep.subr.bf16.mxu0 0
    %1853 = vmatpush2.bf16.msra.mxu0 %v1760
    %1854 = vmatprep.subr.bf16.mxu0 0
    %1855 = vmatpush2.bf16.msra.mxu0 %v1759
    %1856 = vmatprep.subr.bf16.mxu0 0
    %1857 = vmatpush2.bf16.msra.mxu0 %v1758
    %1858 = vmatprep.subr.bf16.mxu0 0
    %1859 = vmatpush2.bf16.msra.mxu0 %v1757
    %1860 = vmatprep.subr.bf16.mxu0 0
    %1861 = vmatpush2.bf16.msra.mxu0 %v1756
    %1862 = vmatprep.subr.bf16.mxu0 0
    %1863 = vmatpush2.bf16.msra.mxu0 %v1755
    %1864 = vmatprep.subr.bf16.mxu0 0
    %1865 = vmatpush2.bf16.msra.mxu0 %v1754
    %1866 = vmatprep.mubr.bf16.mxu0 %v1530
    %1867 = vmatmul.mubr.bf16.gmra.mxu0 %v1529
    %v1868 = vpop.f32.mrf.mxu0
    %v1869 = vadd.f32 %v1829, %v1868
    %v1870 = vpop.f32.mrf.mxu0
    %v1871 = vpop.f32.mrf.mxu0
    %v1872 = vpop.f32.mrf.mxu0
    %1873 = vdwg.mxu0
    %1874 = vst [vmem:[#allocation8] sm:$0xff] %v1869
    // Predicated region
    $region42: #{net_forward.1} parent=1 // pred_check
      _
    $region43: #{net_forward.1} parent=1 // pred_check_branch
      %1876 = sbr.rel (0) target = $region45
    $region44: #{net_forward.1} parent=1 // pred_region
      %s1878 = ssub.s32 128, 128
      %1879 = vsyncadd [#allocation4], %s1878
      %s1881 = sshll.u32 [#allocation8], 4
      %s1882 = int_to_ptr.vmem [resolvable:$true] %s1881
      %1884 = dma.vmem_to_hbm [thread:$0]  %s1882, 128, %s7, [#allocation4]
    $region45: #{net_forward.1} parent=1 // pred_fallthru
      _
    // Predicated region
    $region46: #{net_forward.1} parent=1 // pred_check
      _
    $region47: #{net_forward.1} parent=1 // pred_check_branch
      %1886 = sbr.rel (0) target = $region49
    $region48: #{net_forward.1} parent=1 // pred_region
      %1887 = dma.done [#allocation4], 128
    $region49: #{net_forward.1} parent=1 // pred_fallthru
      _
    %1888 = vsyncpa [#allocation3], 1
    %1889 = vsyncpa [#allocation6], 1
    %1890 = vsyncpa [#allocation4], 1

</llo_original>
